<compile_context>
chip_gen: v7x
topology: tpu7x:2x2x1
jax: 0.10.0
libtpu: 0.0.40
codegen_flags: <defaults>
</compile_context>

<pallas_src>
import functools
import math

import jax
import jax.numpy as jnp
from jax.experimental import pallas as pl
from jax.experimental.pallas import tpu as pltpu


_MARG = 8          # left margin (>= max pad) so every tap-window start is >= 0
_DILS = (2, 4)     # dconv1 / dconv2 dilations (== their paddings in the module)


def _round_up(x, m):
    return (x + m - 1) // m * m


def bn_fold(bn, eps=1e-5):
    """Fold eval-mode BatchNorm into a per-channel scale/bias."""
    scale = bn["g"] / jnp.sqrt(bn["v"] + eps)
    return scale, bn["b"] - bn["m"] * scale


# ---------------------------------------------------------------------------
# Fused kernel: dual dilated-conv3x3 (stacked-K im2col) + BN(eval) + PReLU
#               + channel concat + 1x1 fuse conv + sigmoid
# ---------------------------------------------------------------------------

def _mlp_kernel(x_ref, w1_ref, w2_ref, wf_ref, s_ref, b_ref, a_ref, o_ref, im_ref,
                *, Wp, Nw, pad, dils, Cin, ch, marg):
    """One image per grid step.

    x_ref  : (Cin, L)        bf16  zero-padded image, spatial flattened (lane dense)
    w*_ref : (ch, 9*Cin)     bf16  stacked-K 3x3 taps of the two dilated convs
    wf_ref : (Cout, 2*ch)    bf16  1x1 fuse-conv weight
    s/b/a  : (2*ch, 1)       f32   folded BN scale / bias, PReLU alpha (both branches)
    o_ref  : (Cout, Nw)            sigmoid(fuse(concat(d1, d2))) on padded-width grid
    im_ref : (2, 9*Cin, Nw)  bf16  im2col scratch (one slab per branch)
    """
    branches = []
    for which, (w_ref, dil) in enumerate(((w1_ref, dils[0]), (w2_ref, dils[1]))):
        # implicit im2col: pay the misaligned-window realignment once, into VMEM
        for t in range(9):                                   # static unroll over taps
            di, dj = t // 3 - 1, t % 3 - 1
            off = marg + (pad + di * dil) * Wp + dj * dil    # static python int
            im_ref[which, t * Cin:(t + 1) * Cin, :] = x_ref[:, off:off + Nw]
        # one stacked-K matmul per branch (K = 9*Cin), f32 MXU accumulation
        acc = jnp.dot(w_ref[...], im_ref[which],
                      preferred_element_type=jnp.float32)    # (ch, Nw)
        lo, hi = which * ch, (which + 1) * ch
        y = acc * s_ref[lo:hi] + b_ref[lo:hi]                # folded BatchNorm (eval)
        y = jnp.where(y >= 0.0, y, a_ref[lo:hi] * y)         # per-channel PReLU
        branches.append(y.astype(jnp.bfloat16))

    dd = jnp.concatenate(branches, axis=0)                   # channel concat (2*ch, Nw)
    out = jnp.dot(wf_ref[...], dd, preferred_element_type=jnp.float32)
    # TODO(synk): nn.Dropout(drop) in eval mode (and with drop=0.0) is an identity.
    o_ref[...] = jax.nn.sigmoid(out).astype(o_ref.dtype)


def fused_mlp(xp, w1, w2, wf, scale, bias, alpha, *, B, Cin, ch, Cout,
              L, Nw, Wp, pad, dils, marg, out_dtype=jnp.float32):
    kern = functools.partial(_mlp_kernel, Wp=Wp, Nw=Nw, pad=pad, dils=dils,
                             Cin=Cin, ch=ch, marg=marg)
    return pl.pallas_call(
        kern,
        out_shape=jax.ShapeDtypeStruct((B, Cout, Nw), out_dtype),
        grid=(B,),
        in_specs=[
            pl.BlockSpec((None, Cin, L), lambda b: (b, 0, 0)),   # padded image (bf16)
            pl.BlockSpec((ch, 9 * Cin), lambda b: (0, 0)),       # stacked-K conv weights
            pl.BlockSpec((ch, 9 * Cin), lambda b: (0, 0)),
            pl.BlockSpec((Cout, 2 * ch), lambda b: (0, 0)),      # 1x1 fuse weight
            pl.BlockSpec((2 * ch, 1), lambda b: (0, 0)),         # BN scale
            pl.BlockSpec((2 * ch, 1), lambda b: (0, 0)),         # BN bias
            pl.BlockSpec((2 * ch, 1), lambda b: (0, 0)),         # PReLU alpha
        ],
        out_specs=pl.BlockSpec((None, Cout, Nw), lambda b: (b, 0, 0)),
        scratch_shapes=[pltpu.VMEM((2, 9 * Cin, Nw), jnp.bfloat16)],
        compiler_params=pltpu.CompilerParams(
            dimension_semantics=("parallel",)),   # B >= 2 keeps both v7x TCs busy
    )(xp, w1, w2, wf, scale, bias, alpha)


# ---------------------------------------------------------------------------
# Mlp forward (NCHW in / NCHW out)
# ---------------------------------------------------------------------------

def mlp_forward(x, params):
    """x: (B, C, H, W) float32 -> (B, Cout, H, W) float32."""
    B, C, H, W = x.shape
    ch = C // 2
    pad = max(_DILS)                       # one shared zero-padded copy of x
    Hp, Wp = H + 2 * pad, W + 2 * pad
    Nw = _round_up(H * Wp, 128)            # lane-dense "wide" spatial extent
    need = _MARG + 2 * pad * Wp + pad + Nw
    L = _round_up(need, 128)

    # invariants the static tap offsets rely on (VMEM OOB is unchecked on TPU)
    assert pad >= max(_DILS) and _MARG >= pad and L >= need
    assert all(0 <= _MARG + (pad + di * d) * Wp + dj * d <= L - Nw
               for d in _DILS for di in (-1, 0, 1) for dj in (-1, 0, 1))

    # pad + flatten spatial once; single host-side bf16 cast; stays channels-major
    xp = jnp.pad(x, ((0, 0), (0, 0), (pad, pad), (pad, pad))).reshape(B, C, Hp * Wp)
    xp = jnp.pad(xp, ((0, 0), (0, 0), (_MARG, L - _MARG - Hp * Wp))).astype(jnp.bfloat16)

    # fold BatchNorm(eval) into per-channel affine; stack the two branches
    s1, b1 = bn_fold(params["dconv1"]["bn"])
    s2, b2 = bn_fold(params["dconv2"]["bn"])
    scale = jnp.concatenate([s1, s2]).reshape(C, 1).astype(jnp.float32)
    bias = jnp.concatenate([b1, b2]).reshape(C, 1).astype(jnp.float32)
    alpha = jnp.concatenate([params["dconv1"]["alpha"],
                             params["dconv2"]["alpha"]]).reshape(C, 1).astype(jnp.float32)

    def stack_taps(w):   # (ch, Cin, 3, 3) -> (ch, 9*Cin), K index = (ki*3+kj)*Cin + cin
        o, i = w.shape[0], w.shape[1]
        return w.transpose(0, 2, 3, 1).reshape(o, 9 * i).astype(jnp.bfloat16)

    cout = params["fuse"]["w"].shape[0]
    wf = params["fuse"]["w"].reshape(cout, C).astype(jnp.bfloat16)

    out_wide = fused_mlp(
        xp, stack_taps(params["dconv1"]["w"]), stack_taps(params["dconv2"]["w"]),
        wf, scale, bias, alpha,
        B=B, Cin=C, ch=ch, Cout=cout, L=L, Nw=Nw, Wp=Wp, pad=pad,
        dils=_DILS, marg=_MARG)                         # (B, Cout, Nw) f32

    # drop the padded-width columns -> NCHW (no transpose needed)
    out = out_wide[:, :, :H * Wp].reshape(B, cout, H, Wp)
    return out[:, :, :, pad:pad + W]


# ---------------------------------------------------------------------------
# Pure-JAX reference (float32) for validation
# ---------------------------------------------------------------------------

def mlp_reference(x, params, eps=1e-5):
    def conv(x, w, dil, pad):
        return jax.lax.conv_general_dilated(
            x, w, window_strides=(1, 1), padding=[(pad, pad), (pad, pad)],
            rhs_dilation=(dil, dil), dimension_numbers=("NCHW", "OIHW", "NCHW"))

    def branch(x, p, dil):
        y = conv(x, p["w"], dil, dil)
        s, b = bn_fold(p["bn"], eps)
        y = y * s[None, :, None, None] + b[None, :, None, None]
        return jnp.where(y >= 0.0, y, p["alpha"][None, :, None, None] * y)

    d1 = branch(x, params["dconv1"], _DILS[0])
    d2 = branch(x, params["dconv2"], _DILS[1])
    dd = jnp.concatenate([d1, d2], axis=1)
    return jax.nn.sigmoid(conv(dd, params["fuse"]["w"], 1, 0))


# ---------------------------------------------------------------------------
# Deterministic parameter init
# ---------------------------------------------------------------------------

def init_params(key, c_in, c_out):
    ks = jax.random.split(key, 5)

    def conv_w(k, cout, cin, ksz):
        fan_in = cin * ksz * ksz
        return jax.random.normal(k, (cout, cin, ksz, ksz), jnp.float32) / math.sqrt(fan_in)

    def bn(k, c):
        k1, k2, k3, k4 = jax.random.split(k, 4)
        return {"g": 1.0 + 0.1 * jax.random.normal(k1, (c,), jnp.float32),
                "b": 0.1 * jax.random.normal(k2, (c,), jnp.float32),
                "m": 0.1 * jax.random.normal(k3, (c,), jnp.float32),
                "v": 1.0 + 0.1 * jnp.abs(jax.random.normal(k4, (c,), jnp.float32))}

    ch = c_in // 2
    return {
        "dconv1": {"w": conv_w(ks[0], ch, c_in, 3), "bn": bn(ks[1], ch),
                   "alpha": jnp.full((ch,), 0.25, jnp.float32)},   # PReLU default
        "dconv2": {"w": conv_w(ks[2], ch, c_in, 3), "bn": bn(ks[3], ch),
                   "alpha": jnp.full((ch,), 0.25, jnp.float32)},
        # TODO(synk): reference conv_block constructs Conv2d(in, in) but BN/PReLU use
        # out_channels; implemented as the only consistent reading (in -> out, no bias).
        "fuse": {"w": conv_w(ks[4], c_out, c_in, 1)},
    }


# ---------------------------------------------------------------------------

if __name__ == "__main__":
    B, C, H, W = 2, 32, 16, 16     # in_features = out_features = 32

    key = jax.random.PRNGKey(0)
    kx, kp = jax.random.split(key)
    x = jax.random.normal(kx, (B, C, H, W), jnp.float32)
    params = init_params(kp, C, C)

    out = jax.jit(mlp_forward)(x, params)
    out = jax.block_until_ready(out)
    assert out.shape == (B, C, H, W), out.shape
    assert bool(jnp.all(jnp.isfinite(out)))

    ref = mlp_reference(x, params)
    err = float(jnp.max(jnp.abs(out - ref)))
    # bf16 input / weights / intermediates with f32 MXU accumulation:
    # loose but bug-catching tolerance.
    assert err < 0.08, f"max abs err vs reference: {err}"

    print("KERNEL_OK")
</pallas_src>

<mosaic_0001>
module attributes {stable_mosaic.version = 11 : i64} {
  func.func @_mlp_kernel(%arg0: i32, %arg1: memref<1x32x640xbf16, #tpu.memory_space<vmem>>, %arg2: memref<16x288xbf16, #tpu.memory_space<vmem>>, %arg3: memref<16x288xbf16, #tpu.memory_space<vmem>>, %arg4: memref<32x32xbf16, #tpu.memory_space<vmem>>, %arg5: memref<32x1xf32, #tpu.memory_space<vmem>>, %arg6: memref<32x1xf32, #tpu.memory_space<vmem>>, %arg7: memref<32x1xf32, #tpu.memory_space<vmem>>, %arg8: memref<1x32x384xf32, #tpu.memory_space<vmem>>, %arg9: memref<2x288x384xbf16, #tpu.memory_space<vmem>>) attributes {dimension_semantics = [#tpu.dimension_semantics<parallel>], iteration_bounds = array<i64: 2>, scalar_prefetch = 0 : i64, scratch_operands = 1 : i64, tpu.core_type = #tpu.core_type<tc>, window_params = [{transform_indices = @transform_0, window_bounds = array<i64: 1, 32, 640>}, {pipeline_mode = #tpu.pipeline_mode<synchronous>, transform_indices = @transform_1, window_bounds = array<i64: 16, 288>}, {pipeline_mode = #tpu.pipeline_mode<synchronous>, transform_indices = @transform_2, window_bounds = array<i64: 16, 288>}, {pipeline_mode = #tpu.pipeline_mode<synchronous>, transform_indices = @transform_3, window_bounds = array<i64: 32, 32>}, {pipeline_mode = #tpu.pipeline_mode<synchronous>, transform_indices = @transform_4, window_bounds = array<i64: 32, 1>}, {pipeline_mode = #tpu.pipeline_mode<synchronous>, transform_indices = @transform_5, window_bounds = array<i64: 32, 1>}, {pipeline_mode = #tpu.pipeline_mode<synchronous>, transform_indices = @transform_6, window_bounds = array<i64: 32, 1>}, {transform_indices = @transform_7, window_bounds = array<i64: 1, 32, 384>}]} {
    %c0 = arith.constant 0 : index
    %c0_0 = arith.constant 0 : index
    %c54 = arith.constant 54 : index
    %0 = vector.load %arg1[%c0, %c0_0, %c54] : memref<1x32x640xbf16, #tpu.memory_space<vmem>>, vector<1x32x384xbf16>
    %1 = vector.shape_cast %0 : vector<1x32x384xbf16> to vector<32x384xbf16>
    %c0_1 = arith.constant 0 : index
    %c0_2 = arith.constant 0 : index
    %c0_3 = arith.constant 0 : index
    %2 = vector.load %arg9[%c0_1, %c0_2, %c0_3] : memref<2x288x384xbf16, #tpu.memory_space<vmem>>, vector<1x32x384xbf16>
    %3 = vector.shape_cast %2 : vector<1x32x384xbf16> to vector<32x384xbf16>
    %4 = vector.shape_cast %1 : vector<32x384xbf16> to vector<1x32x384xbf16>
    tpu.vector_store %arg9[%c0_1, %c0_2, %c0_3], %4 {strides = array<i32>} : memref<2x288x384xbf16, #tpu.memory_space<vmem>>, vector<1x32x384xbf16>,
    %c0_4 = arith.constant 0 : index
    %c0_5 = arith.constant 0 : index
    %c56 = arith.constant 56 : index
    %5 = vector.load %arg1[%c0_4, %c0_5, %c56] : memref<1x32x640xbf16, #tpu.memory_space<vmem>>, vector<1x32x384xbf16>
    %6 = vector.shape_cast %5 : vector<1x32x384xbf16> to vector<32x384xbf16>
    %c0_6 = arith.constant 0 : index
    %c32 = arith.constant 32 : index
    %c0_7 = arith.constant 0 : index
    %7 = vector.load %arg9[%c0_6, %c32, %c0_7] : memref<2x288x384xbf16, #tpu.memory_space<vmem>>, vector<1x32x384xbf16>
    %8 = vector.shape_cast %7 : vector<1x32x384xbf16> to vector<32x384xbf16>
    %9 = vector.shape_cast %6 : vector<32x384xbf16> to vector<1x32x384xbf16>
    tpu.vector_store %arg9[%c0_6, %c32, %c0_7], %9 {strides = array<i32>} : memref<2x288x384xbf16, #tpu.memory_space<vmem>>, vector<1x32x384xbf16>,
    %c0_8 = arith.constant 0 : index
    %c0_9 = arith.constant 0 : index
    %c58 = arith.constant 58 : index
    %10 = vector.load %arg1[%c0_8, %c0_9, %c58] : memref<1x32x640xbf16, #tpu.memory_space<vmem>>, vector<1x32x384xbf16>
    %11 = vector.shape_cast %10 : vector<1x32x384xbf16> to vector<32x384xbf16>
    %c0_10 = arith.constant 0 : index
    %c64 = arith.constant 64 : index
    %c0_11 = arith.constant 0 : index
    %12 = vector.load %arg9[%c0_10, %c64, %c0_11] : memref<2x288x384xbf16, #tpu.memory_space<vmem>>, vector<1x32x384xbf16>
    %13 = vector.shape_cast %12 : vector<1x32x384xbf16> to vector<32x384xbf16>
    %14 = vector.shape_cast %11 : vector<32x384xbf16> to vector<1x32x384xbf16>
    tpu.vector_store %arg9[%c0_10, %c64, %c0_11], %14 {strides = array<i32>} : memref<2x288x384xbf16, #tpu.memory_space<vmem>>, vector<1x32x384xbf16>,
    %c0_12 = arith.constant 0 : index
    %c0_13 = arith.constant 0 : index
    %c102 = arith.constant 102 : index
    %15 = vector.load %arg1[%c0_12, %c0_13, %c102] : memref<1x32x640xbf16, #tpu.memory_space<vmem>>, vector<1x32x384xbf16>
    %16 = vector.shape_cast %15 : vector<1x32x384xbf16> to vector<32x384xbf16>
    %c0_14 = arith.constant 0 : index
    %c96 = arith.constant 96 : index
    %c0_15 = arith.constant 0 : index
    %17 = vector.load %arg9[%c0_14, %c96, %c0_15] : memref<2x288x384xbf16, #tpu.memory_space<vmem>>, vector<1x32x384xbf16>
    %18 = vector.shape_cast %17 : vector<1x32x384xbf16> to vector<32x384xbf16>
    %19 = vector.shape_cast %16 : vector<32x384xbf16> to vector<1x32x384xbf16>
    tpu.vector_store %arg9[%c0_14, %c96, %c0_15], %19 {strides = array<i32>} : memref<2x288x384xbf16, #tpu.memory_space<vmem>>, vector<1x32x384xbf16>,
    %c0_16 = arith.constant 0 : index
    %c0_17 = arith.constant 0 : index
    %c104 = arith.constant 104 : index
    %20 = vector.load %arg1[%c0_16, %c0_17, %c104] : memref<1x32x640xbf16, #tpu.memory_space<vmem>>, vector<1x32x384xbf16>
    %21 = vector.shape_cast %20 : vector<1x32x384xbf16> to vector<32x384xbf16>
    %c0_18 = arith.constant 0 : index
    %c128 = arith.constant 128 : index
    %c0_19 = arith.constant 0 : index
    %22 = vector.load %arg9[%c0_18, %c128, %c0_19] : memref<2x288x384xbf16, #tpu.memory_space<vmem>>, vector<1x32x384xbf16>
    %23 = vector.shape_cast %22 : vector<1x32x384xbf16> to vector<32x384xbf16>
    %24 = vector.shape_cast %21 : vector<32x384xbf16> to vector<1x32x384xbf16>
    tpu.vector_store %arg9[%c0_18, %c128, %c0_19], %24 {strides = array<i32>} : memref<2x288x384xbf16, #tpu.memory_space<vmem>>, vector<1x32x384xbf16>,
    %c0_20 = arith.constant 0 : index
    %c0_21 = arith.constant 0 : index
    %c106 = arith.constant 106 : index
    %25 = vector.load %arg1[%c0_20, %c0_21, %c106] : memref<1x32x640xbf16, #tpu.memory_space<vmem>>, vector<1x32x384xbf16>
    %26 = vector.shape_cast %25 : vector<1x32x384xbf16> to vector<32x384xbf16>
    %c0_22 = arith.constant 0 : index
    %c160 = arith.constant 160 : index
    %c0_23 = arith.constant 0 : index
    %27 = vector.load %arg9[%c0_22, %c160, %c0_23] : memref<2x288x384xbf16, #tpu.memory_space<vmem>>, vector<1x32x384xbf16>
    %28 = vector.shape_cast %27 : vector<1x32x384xbf16> to vector<32x384xbf16>
    %29 = vector.shape_cast %26 : vector<32x384xbf16> to vector<1x32x384xbf16>
    tpu.vector_store %arg9[%c0_22, %c160, %c0_23], %29 {strides = array<i32>} : memref<2x288x384xbf16, #tpu.memory_space<vmem>>, vector<1x32x384xbf16>,
    %c0_24 = arith.constant 0 : index
    %c0_25 = arith.constant 0 : index
    %c150 = arith.constant 150 : index
    %30 = vector.load %arg1[%c0_24, %c0_25, %c150] : memref<1x32x640xbf16, #tpu.memory_space<vmem>>, vector<1x32x384xbf16>
    %31 = vector.shape_cast %30 : vector<1x32x384xbf16> to vector<32x384xbf16>
    %c0_26 = arith.constant 0 : index
    %c192 = arith.constant 192 : index
    %c0_27 = arith.constant 0 : index
    %32 = vector.load %arg9[%c0_26, %c192, %c0_27] : memref<2x288x384xbf16, #tpu.memory_space<vmem>>, vector<1x32x384xbf16>
    %33 = vector.shape_cast %32 : vector<1x32x384xbf16> to vector<32x384xbf16>
    %34 = vector.shape_cast %31 : vector<32x384xbf16> to vector<1x32x384xbf16>
    tpu.vector_store %arg9[%c0_26, %c192, %c0_27], %34 {strides = array<i32>} : memref<2x288x384xbf16, #tpu.memory_space<vmem>>, vector<1x32x384xbf16>,
    %c0_28 = arith.constant 0 : index
    %c0_29 = arith.constant 0 : index
    %c152 = arith.constant 152 : index
    %35 = vector.load %arg1[%c0_28, %c0_29, %c152] : memref<1x32x640xbf16, #tpu.memory_space<vmem>>, vector<1x32x384xbf16>
    %36 = vector.shape_cast %35 : vector<1x32x384xbf16> to vector<32x384xbf16>
    %c0_30 = arith.constant 0 : index
    %c224 = arith.constant 224 : index
    %c0_31 = arith.constant 0 : index
    %37 = vector.load %arg9[%c0_30, %c224, %c0_31] : memref<2x288x384xbf16, #tpu.memory_space<vmem>>, vector<1x32x384xbf16>
    %38 = vector.shape_cast %37 : vector<1x32x384xbf16> to vector<32x384xbf16>
    %39 = vector.shape_cast %36 : vector<32x384xbf16> to vector<1x32x384xbf16>
    tpu.vector_store %arg9[%c0_30, %c224, %c0_31], %39 {strides = array<i32>} : memref<2x288x384xbf16, #tpu.memory_space<vmem>>, vector<1x32x384xbf16>,
    %c0_32 = arith.constant 0 : index
    %c0_33 = arith.constant 0 : index
    %c154 = arith.constant 154 : index
    %40 = vector.load %arg1[%c0_32, %c0_33, %c154] : memref<1x32x640xbf16, #tpu.memory_space<vmem>>, vector<1x32x384xbf16>
    %41 = vector.shape_cast %40 : vector<1x32x384xbf16> to vector<32x384xbf16>
    %c0_34 = arith.constant 0 : index
    %c256 = arith.constant 256 : index
    %c0_35 = arith.constant 0 : index
    %42 = vector.load %arg9[%c0_34, %c256, %c0_35] : memref<2x288x384xbf16, #tpu.memory_space<vmem>>, vector<1x32x384xbf16>
    %43 = vector.shape_cast %42 : vector<1x32x384xbf16> to vector<32x384xbf16>
    %44 = vector.shape_cast %41 : vector<32x384xbf16> to vector<1x32x384xbf16>
    tpu.vector_store %arg9[%c0_34, %c256, %c0_35], %44 {strides = array<i32>} : memref<2x288x384xbf16, #tpu.memory_space<vmem>>, vector<1x32x384xbf16>,
    %c0_36 = arith.constant 0 : index
    %c0_37 = arith.constant 0 : index
    %45 = vector.load %arg2[%c0_36, %c0_37] : memref<16x288xbf16, #tpu.memory_space<vmem>>, vector<16x288xbf16>
    %c0_38 = arith.constant 0 : index
    %c0_39 = arith.constant 0 : index
    %c0_40 = arith.constant 0 : index
    %46 = vector.load %arg9[%c0_38, %c0_39, %c0_40] : memref<2x288x384xbf16, #tpu.memory_space<vmem>>, vector<1x288x384xbf16>
    %47 = vector.shape_cast %46 : vector<1x288x384xbf16> to vector<288x384xbf16>
    %cst = arith.constant dense<0.000000e+00> : vector<16x384xf32>
    %48 = tpu.matmul %45, %47, %cst {dimension_numbers = #tpu.dot_dimension_numbers<[1], [0], [0], [1], [0, 0, 1, 1], [], []>} : vector<16x288xbf16>, vector<288x384xbf16>, vector<16x384xf32> -> vector<16x384xf32>
    %c0_41 = arith.constant 0 : index
    %c0_42 = arith.constant 0 : index
    %49 = vector.load %arg5[%c0_41, %c0_42] : memref<32x1xf32, #tpu.memory_space<vmem>>, vector<16x1xf32>
    %50 = vector.broadcast %49 : vector<16x1xf32> to vector<16x384xf32>
    %51 = arith.mulf %48, %50 : vector<16x384xf32>
    %c0_43 = arith.constant 0 : index
    %c0_44 = arith.constant 0 : index
    %52 = vector.load %arg6[%c0_43, %c0_44] : memref<32x1xf32, #tpu.memory_space<vmem>>, vector<16x1xf32>
    %53 = vector.broadcast %52 : vector<16x1xf32> to vector<16x384xf32>
    %54 = arith.addf %51, %53 : vector<16x384xf32>
    %cst_45 = arith.constant 0.000000e+00 : f32
    %55 = vector.broadcast %cst_45 : f32 to vector<16x384xf32>
    %56 = arith.cmpf oge, %54, %55 : vector<16x384xf32>
    %c0_46 = arith.constant 0 : index
    %c0_47 = arith.constant 0 : index
    %57 = vector.load %arg7[%c0_46, %c0_47] : memref<32x1xf32, #tpu.memory_space<vmem>>, vector<16x1xf32>
    %58 = vector.broadcast %57 : vector<16x1xf32> to vector<16x384xf32>
    %59 = arith.mulf %58, %54 : vector<16x384xf32>
    %60 = arith.select %56, %54, %59 : vector<16x384xi1>, vector<16x384xf32>
    %61 = arith.truncf %60 : vector<16x384xf32> to vector<16x384xbf16>
    %c0_48 = arith.constant 0 : index
    %c0_49 = arith.constant 0 : index
    %c4 = arith.constant 4 : index
    %62 = vector.load %arg1[%c0_48, %c0_49, %c4] : memref<1x32x640xbf16, #tpu.memory_space<vmem>>, vector<1x32x384xbf16>
    %63 = vector.shape_cast %62 : vector<1x32x384xbf16> to vector<32x384xbf16>
    %c1 = arith.constant 1 : index
    %c0_50 = arith.constant 0 : index
    %c0_51 = arith.constant 0 : index
    %64 = vector.load %arg9[%c1, %c0_50, %c0_51] : memref<2x288x384xbf16, #tpu.memory_space<vmem>>, vector<1x32x384xbf16>
    %65 = vector.shape_cast %64 : vector<1x32x384xbf16> to vector<32x384xbf16>
    %66 = vector.shape_cast %63 : vector<32x384xbf16> to vector<1x32x384xbf16>
    tpu.vector_store %arg9[%c1, %c0_50, %c0_51], %66 {strides = array<i32>} : memref<2x288x384xbf16, #tpu.memory_space<vmem>>, vector<1x32x384xbf16>,
    %c0_52 = arith.constant 0 : index
    %c0_53 = arith.constant 0 : index
    %c8 = arith.constant 8 : index
    %67 = vector.load %arg1[%c0_52, %c0_53, %c8] : memref<1x32x640xbf16, #tpu.memory_space<vmem>>, vector<1x32x384xbf16>
    %68 = vector.shape_cast %67 : vector<1x32x384xbf16> to vector<32x384xbf16>
    %c1_54 = arith.constant 1 : index
    %c32_55 = arith.constant 32 : index
    %c0_56 = arith.constant 0 : index
    %69 = vector.load %arg9[%c1_54, %c32_55, %c0_56] : memref<2x288x384xbf16, #tpu.memory_space<vmem>>, vector<1x32x384xbf16>
    %70 = vector.shape_cast %69 : vector<1x32x384xbf16> to vector<32x384xbf16>
    %71 = vector.shape_cast %68 : vector<32x384xbf16> to vector<1x32x384xbf16>
    tpu.vector_store %arg9[%c1_54, %c32_55, %c0_56], %71 {strides = array<i32>} : memref<2x288x384xbf16, #tpu.memory_space<vmem>>, vector<1x32x384xbf16>,
    %c0_57 = arith.constant 0 : index
    %c0_58 = arith.constant 0 : index
    %c12 = arith.constant 12 : index
    %72 = vector.load %arg1[%c0_57, %c0_58, %c12] : memref<1x32x640xbf16, #tpu.memory_space<vmem>>, vector<1x32x384xbf16>
    %73 = vector.shape_cast %72 : vector<1x32x384xbf16> to vector<32x384xbf16>
    %c1_59 = arith.constant 1 : index
    %c64_60 = arith.constant 64 : index
    %c0_61 = arith.constant 0 : index
    %74 = vector.load %arg9[%c1_59, %c64_60, %c0_61] : memref<2x288x384xbf16, #tpu.memory_space<vmem>>, vector<1x32x384xbf16>
    %75 = vector.shape_cast %74 : vector<1x32x384xbf16> to vector<32x384xbf16>
    %76 = vector.shape_cast %73 : vector<32x384xbf16> to vector<1x32x384xbf16>
    tpu.vector_store %arg9[%c1_59, %c64_60, %c0_61], %76 {strides = array<i32>} : memref<2x288x384xbf16, #tpu.memory_space<vmem>>, vector<1x32x384xbf16>,
    %c0_62 = arith.constant 0 : index
    %c0_63 = arith.constant 0 : index
    %c100 = arith.constant 100 : index
    %77 = vector.load %arg1[%c0_62, %c0_63, %c100] : memref<1x32x640xbf16, #tpu.memory_space<vmem>>, vector<1x32x384xbf16>
    %78 = vector.shape_cast %77 : vector<1x32x384xbf16> to vector<32x384xbf16>
    %c1_64 = arith.constant 1 : index
    %c96_65 = arith.constant 96 : index
    %c0_66 = arith.constant 0 : index
    %79 = vector.load %arg9[%c1_64, %c96_65, %c0_66] : memref<2x288x384xbf16, #tpu.memory_space<vmem>>, vector<1x32x384xbf16>
    %80 = vector.shape_cast %79 : vector<1x32x384xbf16> to vector<32x384xbf16>
    %81 = vector.shape_cast %78 : vector<32x384xbf16> to vector<1x32x384xbf16>
    tpu.vector_store %arg9[%c1_64, %c96_65, %c0_66], %81 {strides = array<i32>} : memref<2x288x384xbf16, #tpu.memory_space<vmem>>, vector<1x32x384xbf16>,
    %c0_67 = arith.constant 0 : index
    %c0_68 = arith.constant 0 : index
    %c104_69 = arith.constant 104 : index
    %82 = vector.load %arg1[%c0_67, %c0_68, %c104_69] : memref<1x32x640xbf16, #tpu.memory_space<vmem>>, vector<1x32x384xbf16>
    %83 = vector.shape_cast %82 : vector<1x32x384xbf16> to vector<32x384xbf16>
    %c1_70 = arith.constant 1 : index
    %c128_71 = arith.constant 128 : index
    %c0_72 = arith.constant 0 : index
    %84 = vector.load %arg9[%c1_70, %c128_71, %c0_72] : memref<2x288x384xbf16, #tpu.memory_space<vmem>>, vector<1x32x384xbf16>
    %85 = vector.shape_cast %84 : vector<1x32x384xbf16> to vector<32x384xbf16>
    %86 = vector.shape_cast %83 : vector<32x384xbf16> to vector<1x32x384xbf16>
    tpu.vector_store %arg9[%c1_70, %c128_71, %c0_72], %86 {strides = array<i32>} : memref<2x288x384xbf16, #tpu.memory_space<vmem>>, vector<1x32x384xbf16>,
    %c0_73 = arith.constant 0 : index
    %c0_74 = arith.constant 0 : index
    %c108 = arith.constant 108 : index
    %87 = vector.load %arg1[%c0_73, %c0_74, %c108] : memref<1x32x640xbf16, #tpu.memory_space<vmem>>, vector<1x32x384xbf16>
    %88 = vector.shape_cast %87 : vector<1x32x384xbf16> to vector<32x384xbf16>
    %c1_75 = arith.constant 1 : index
    %c160_76 = arith.constant 160 : index
    %c0_77 = arith.constant 0 : index
    %89 = vector.load %arg9[%c1_75, %c160_76, %c0_77] : memref<2x288x384xbf16, #tpu.memory_space<vmem>>, vector<1x32x384xbf16>
    %90 = vector.shape_cast %89 : vector<1x32x384xbf16> to vector<32x384xbf16>
    %91 = vector.shape_cast %88 : vector<32x384xbf16> to vector<1x32x384xbf16>
    tpu.vector_store %arg9[%c1_75, %c160_76, %c0_77], %91 {strides = array<i32>} : memref<2x288x384xbf16, #tpu.memory_space<vmem>>, vector<1x32x384xbf16>,
    %c0_78 = arith.constant 0 : index
    %c0_79 = arith.constant 0 : index
    %c196 = arith.constant 196 : index
    %92 = vector.load %arg1[%c0_78, %c0_79, %c196] : memref<1x32x640xbf16, #tpu.memory_space<vmem>>, vector<1x32x384xbf16>
    %93 = vector.shape_cast %92 : vector<1x32x384xbf16> to vector<32x384xbf16>
    %c1_80 = arith.constant 1 : index
    %c192_81 = arith.constant 192 : index
    %c0_82 = arith.constant 0 : index
    %94 = vector.load %arg9[%c1_80, %c192_81, %c0_82] : memref<2x288x384xbf16, #tpu.memory_space<vmem>>, vector<1x32x384xbf16>
    %95 = vector.shape_cast %94 : vector<1x32x384xbf16> to vector<32x384xbf16>
    %96 = vector.shape_cast %93 : vector<32x384xbf16> to vector<1x32x384xbf16>
    tpu.vector_store %arg9[%c1_80, %c192_81, %c0_82], %96 {strides = array<i32>} : memref<2x288x384xbf16, #tpu.memory_space<vmem>>, vector<1x32x384xbf16>,
    %c0_83 = arith.constant 0 : index
    %c0_84 = arith.constant 0 : index
    %c200 = arith.constant 200 : index
    %97 = vector.load %arg1[%c0_83, %c0_84, %c200] : memref<1x32x640xbf16, #tpu.memory_space<vmem>>, vector<1x32x384xbf16>
    %98 = vector.shape_cast %97 : vector<1x32x384xbf16> to vector<32x384xbf16>
    %c1_85 = arith.constant 1 : index
    %c224_86 = arith.constant 224 : index
    %c0_87 = arith.constant 0 : index
    %99 = vector.load %arg9[%c1_85, %c224_86, %c0_87] : memref<2x288x384xbf16, #tpu.memory_space<vmem>>, vector<1x32x384xbf16>
    %100 = vector.shape_cast %99 : vector<1x32x384xbf16> to vector<32x384xbf16>
    %101 = vector.shape_cast %98 : vector<32x384xbf16> to vector<1x32x384xbf16>
    tpu.vector_store %arg9[%c1_85, %c224_86, %c0_87], %101 {strides = array<i32>} : memref<2x288x384xbf16, #tpu.memory_space<vmem>>, vector<1x32x384xbf16>,
    %c0_88 = arith.constant 0 : index
    %c0_89 = arith.constant 0 : index
    %c204 = arith.constant 204 : index
    %102 = vector.load %arg1[%c0_88, %c0_89, %c204] : memref<1x32x640xbf16, #tpu.memory_space<vmem>>, vector<1x32x384xbf16>
    %103 = vector.shape_cast %102 : vector<1x32x384xbf16> to vector<32x384xbf16>
    %c1_90 = arith.constant 1 : index
    %c256_91 = arith.constant 256 : index
    %c0_92 = arith.constant 0 : index
    %104 = vector.load %arg9[%c1_90, %c256_91, %c0_92] : memref<2x288x384xbf16, #tpu.memory_space<vmem>>, vector<1x32x384xbf16>
    %105 = vector.shape_cast %104 : vector<1x32x384xbf16> to vector<32x384xbf16>
    %106 = vector.shape_cast %103 : vector<32x384xbf16> to vector<1x32x384xbf16>
    tpu.vector_store %arg9[%c1_90, %c256_91, %c0_92], %106 {strides = array<i32>} : memref<2x288x384xbf16, #tpu.memory_space<vmem>>, vector<1x32x384xbf16>,
    %c0_93 = arith.constant 0 : index
    %c0_94 = arith.constant 0 : index
    %107 = vector.load %arg3[%c0_93, %c0_94] : memref<16x288xbf16, #tpu.memory_space<vmem>>, vector<16x288xbf16>
    %c1_95 = arith.constant 1 : index
    %c0_96 = arith.constant 0 : index
    %c0_97 = arith.constant 0 : index
    %108 = vector.load %arg9[%c1_95, %c0_96, %c0_97] : memref<2x288x384xbf16, #tpu.memory_space<vmem>>, vector<1x288x384xbf16>
    %109 = vector.shape_cast %108 : vector<1x288x384xbf16> to vector<288x384xbf16>
    %cst_98 = arith.constant dense<0.000000e+00> : vector<16x384xf32>
    %110 = tpu.matmul %107, %109, %cst_98 {dimension_numbers = #tpu.dot_dimension_numbers<[1], [0], [0], [1], [0, 0, 1, 1], [], []>} : vector<16x288xbf16>, vector<288x384xbf16>, vector<16x384xf32> -> vector<16x384xf32>
    %c16 = arith.constant 16 : index
    %c0_99 = arith.constant 0 : index
    %111 = vector.load %arg5[%c16, %c0_99] : memref<32x1xf32, #tpu.memory_space<vmem>>, vector<16x1xf32>
    %112 = vector.broadcast %111 : vector<16x1xf32> to vector<16x384xf32>
    %113 = arith.mulf %110, %112 : vector<16x384xf32>
    %c16_100 = arith.constant 16 : index
    %c0_101 = arith.constant 0 : index
    %114 = vector.load %arg6[%c16_100, %c0_101] : memref<32x1xf32, #tpu.memory_space<vmem>>, vector<16x1xf32>
    %115 = vector.broadcast %114 : vector<16x1xf32> to vector<16x384xf32>
    %116 = arith.addf %113, %115 : vector<16x384xf32>
    %cst_102 = arith.constant 0.000000e+00 : f32
    %117 = vector.broadcast %cst_102 : f32 to vector<16x384xf32>
    %118 = arith.cmpf oge, %116, %117 : vector<16x384xf32>
    %c16_103 = arith.constant 16 : index
    %c0_104 = arith.constant 0 : index
    %119 = vector.load %arg7[%c16_103, %c0_104] : memref<32x1xf32, #tpu.memory_space<vmem>>, vector<16x1xf32>
    %120 = vector.broadcast %119 : vector<16x1xf32> to vector<16x384xf32>
    %121 = arith.mulf %120, %116 : vector<16x384xf32>
    %122 = arith.select %118, %116, %121 : vector<16x384xi1>, vector<16x384xf32>
    %123 = arith.truncf %122 : vector<16x384xf32> to vector<16x384xbf16>
    %124 = tpu.concatenate %61, %123 in 0 : vector<16x384xbf16>, vector<16x384xbf16> -> vector<32x384xbf16>
    %c0_105 = arith.constant 0 : index
    %c0_106 = arith.constant 0 : index
    %125 = vector.load %arg4[%c0_105, %c0_106] : memref<32x32xbf16, #tpu.memory_space<vmem>>, vector<32x32xbf16>
    %cst_107 = arith.constant dense<0.000000e+00> : vector<32x384xf32>
    %126 = tpu.matmul %125, %124, %cst_107 {dimension_numbers = #tpu.dot_dimension_numbers<[1], [0], [0], [1], [0, 0, 1, 1], [], []>} : vector<32x32xbf16>, vector<32x384xbf16>, vector<32x384xf32> -> vector<32x384xf32>
    %127 = arith.negf %126 : vector<32x384xf32>
    %128 = math.exp %127 : vector<32x384xf32>
    %cst_108 = arith.constant 1.000000e+00 : f32
    %129 = vector.broadcast %cst_108 : f32 to vector<32x384xf32>
    %130 = arith.addf %129, %128 : vector<32x384xf32>
    %131 = arith.divf %129, %130 : vector<32x384xf32>
    %c0_109 = arith.constant 0 : index
    %c0_110 = arith.constant 0 : index
    %c0_111 = arith.constant 0 : index
    %132 = vector.load %arg8[%c0_109, %c0_110, %c0_111] : memref<1x32x384xf32, #tpu.memory_space<vmem>>, vector<1x32x384xf32>
    %133 = vector.shape_cast %132 : vector<1x32x384xf32> to vector<32x384xf32>
    %134 = vector.shape_cast %131 : vector<32x384xf32> to vector<1x32x384xf32>
    tpu.vector_store %arg8[%c0_109, %c0_110, %c0_111], %134 {strides = array<i32>} : memref<1x32x384xf32, #tpu.memory_space<vmem>>, vector<1x32x384xf32>,
    return
  }
  func.func @transform_0(%arg0: i32) -> (i32, i32, i32) {
    %c0_i32 = arith.constant 0 : i32
    %c0_i32_0 = arith.constant 0 : i32
    %c0_i32_1 = arith.constant 0 : i32
    return %arg0, %c0_i32, %c0_i32_0 : i32, i32, i32
  }
  func.func @transform_1(%arg0: i32) -> (i32, i32) {
    %c0_i32 = arith.constant 0 : i32
    %c0_i32_0 = arith.constant 0 : i32
    %c0_i32_1 = arith.constant 0 : i32
    return %c0_i32, %c0_i32_0 : i32, i32
  }
  func.func @transform_2(%arg0: i32) -> (i32, i32) {
    %c0_i32 = arith.constant 0 : i32
    %c0_i32_0 = arith.constant 0 : i32
    %c0_i32_1 = arith.constant 0 : i32
    return %c0_i32, %c0_i32_0 : i32, i32
  }
  func.func @transform_3(%arg0: i32) -> (i32, i32) {
    %c0_i32 = arith.constant 0 : i32
    %c0_i32_0 = arith.constant 0 : i32
    %c0_i32_1 = arith.constant 0 : i32
    return %c0_i32, %c0_i32_0 : i32, i32
  }
  func.func @transform_4(%arg0: i32) -> (i32, i32) {
    %c0_i32 = arith.constant 0 : i32
    %c0_i32_0 = arith.constant 0 : i32
    %c0_i32_1 = arith.constant 0 : i32
    return %c0_i32, %c0_i32_0 : i32, i32
  }
  func.func @transform_5(%arg0: i32) -> (i32, i32) {
    %c0_i32 = arith.constant 0 : i32
    %c0_i32_0 = arith.constant 0 : i32
    %c0_i32_1 = arith.constant 0 : i32
    return %c0_i32, %c0_i32_0 : i32, i32
  }
  func.func @transform_6(%arg0: i32) -> (i32, i32) {
    %c0_i32 = arith.constant 0 : i32
    %c0_i32_0 = arith.constant 0 : i32
    %c0_i32_1 = arith.constant 0 : i32
    return %c0_i32, %c0_i32_0 : i32, i32
  }
  func.func @transform_7(%arg0: i32) -> (i32, i32, i32) {
    %c0_i32 = arith.constant 0 : i32
    %c0_i32_0 = arith.constant 0 : i32
    %c0_i32_1 = arith.constant 0 : i32
    return %arg0, %c0_i32, %c0_i32_0 : i32, i32, i32
  }
}

</mosaic_0001>

<llo_original>
// kernel: mlp_forward.1
$region0: #{mlp_forward.1}
  #allocation0 [shape = 'u32[]', space=smem, size = 0x4, offset = 0x4, fixed_abs, tag = 'smem constant byte address 0x4 - core index']
  #allocation1 [shape = 'u32[144,128]{1,0:T(1,128)}', space=vmem, size = 0x12000, scoped, tag = 'internal scratch']
  #allocation2 [shape = 'bf16[2,288,384]{2,1,0:T(16,128)(2,1)}', space=vmem, size = 0x6c000, scoped, tag = 'scratch operand']
  %s0 = inlined_call_operand.vmem [shape: bf16[2,32,640], index: 0, kind: input, shape index: {}]
  %s1 = inlined_call_operand.vmem [shape: bf16[16,288], index: 1, kind: input, shape index: {}]
  %s2 = inlined_call_operand.vmem [shape: bf16[16,288], index: 2, kind: input, shape index: {}]
  %s3 = inlined_call_operand.vmem [shape: bf16[32,32], index: 3, kind: input, shape index: {}]
  %s4 = inlined_call_operand.vmem [shape: f32[32,1], index: 4, kind: input, shape index: {}]
  %s5 = inlined_call_operand.vmem [shape: f32[32,1], index: 5, kind: input, shape index: {}]
  %s6 = inlined_call_operand.vmem [shape: f32[32,1], index: 6, kind: input, shape index: {}]
  %s7 = inlined_call_operand.vmem [shape: f32[2,32,384], index: 7, kind: output, shape index: {}]
  %s8 = sld [smem:[#allocation0]]
  $region61: #{mlp_forward.1} parent=0
    _
  %s10 = ssub.s32 1, %s8
  %s11 = scalar_select 0, %s10, %s8
  loop: start=0, step=1, limit=4
  $region2: #{mlp_forward.1} parent=0 // loop_pre_header
    _
  $region3: #{mlp_forward.1} parent=0 // loop_header
    %s13 = sphi 0, %s17
    %p14 = scmp.ge.s32.totalorder %s13, 4
    %s23 = sphi 0, %s25
    %s26 = sphi 0, %s23
    %s27 = sphi 0, %s26
    %s43 = sphi 0, %s27
    %s47 = sphi 0, %s47
    %s49 = sphi 0, %s47
    %s50 = sphi 0, %s49
    %s64 = sphi 0, %s50
    %s68 = sphi 0, %s68
    %s70 = sphi 0, %s68
    %s71 = sphi 0, %s70
    %s85 = sphi 0, %s71
    %s89 = sphi 0, %s89
    %s91 = sphi 0, %s89
    %s92 = sphi 0, %s91
    %s106 = sphi 0, %s92
    %s110 = sphi 0, %s110
    %s112 = sphi 0, %s110
    %s113 = sphi 0, %s112
    %s127 = sphi 0, %s113
    %s131 = sphi 0, %s131
    %s133 = sphi 0, %s131
    %s134 = sphi 0, %s133
    %s148 = sphi 0, %s134
    %s152 = sphi 0, %s152
    %s154 = sphi 0, %s152
    %s155 = sphi 0, %s154
    %s169 = sphi 0, %s155
    %s175 = sphi 0, %s177
    %s178 = sphi 0, %s175
    %s179 = sphi 0, %s178
    %s195 = sphi 0, %s179
  $region4: #{mlp_forward.1} parent=0 // loop_header_branch
    %16 = sbr.rel (%p14) target = $region8
  $region5: #{mlp_forward.1} parent=0 // loop_body
    %s18 = ssub.s32 %s13, 1
    %s19 = ssub.s32 %s13, 2
    %s20 = sadd.s32 %s13, 1
    %s21 = ssub.s32 %s13, %s20
    %p22 = scmp.eq.s32.totalorder %s21, 0
    %s24 = sadd.s32 %s23, 1
    %s25 = scalar_select %p22, %s23, %s24
    %p28 = pneg %p22
    %p29 = scmp.eq.s32.totalorder %s13, 1
    %p30 = por %p28, %p29
    %p31 = scmp.ne.s32.totalorder %s23, %s26
    %p32 = scmp.eq.s32.totalorder %s13, 0
    %p33 = por %p31, %p32
    %p34 = scmp.ne.s32.totalorder %s23, %s26
    %p35 = scmp.eq.s32.totalorder %s18, 1
    %p36 = por %p34, %p35
    %p37 = scmp.ne.s32.totalorder %s26, %s27
    %p38 = scmp.eq.s32.totalorder %s18, 0
    %p39 = por %p37, %p38
    %p40 = scmp.ne.s32.totalorder %s26, %s27
    %p41 = scmp.eq.s32.totalorder %s19, 1
    %p42 = por %p40, %p41
    %p44 = scmp.ne.s32.totalorder %s27, %s43
    %p45 = scmp.eq.s32.totalorder %s19, 0
    %p46 = por %p44, %p45
    %s48 = sadd.s32 %s47, 1
    %p51 = scmp.eq.s32.totalorder %s13, 1
    %p52 = scmp.ne.s32.totalorder %s47, %s49
    %p53 = scmp.eq.s32.totalorder %s13, 0
    %p54 = por %p52, %p53
    %p55 = scmp.ne.s32.totalorder %s47, %s49
    %p56 = scmp.eq.s32.totalorder %s18, 1
    %p57 = por %p55, %p56
    %p58 = scmp.ne.s32.totalorder %s49, %s50
    %p59 = scmp.eq.s32.totalorder %s18, 0
    %p60 = por %p58, %p59
    %p61 = scmp.ne.s32.totalorder %s49, %s50
    %p62 = scmp.eq.s32.totalorder %s19, 1
    %p63 = por %p61, %p62
    %p65 = scmp.ne.s32.totalorder %s50, %s64
    %p66 = scmp.eq.s32.totalorder %s19, 0
    %p67 = por %p65, %p66
    %s69 = sadd.s32 %s68, 1
    %p72 = scmp.eq.s32.totalorder %s13, 1
    %p73 = scmp.ne.s32.totalorder %s68, %s70
    %p74 = scmp.eq.s32.totalorder %s13, 0
    %p75 = por %p73, %p74
    %p76 = scmp.ne.s32.totalorder %s68, %s70
    %p77 = scmp.eq.s32.totalorder %s18, 1
    %p78 = por %p76, %p77
    %p79 = scmp.ne.s32.totalorder %s70, %s71
    %p80 = scmp.eq.s32.totalorder %s18, 0
    %p81 = por %p79, %p80
    %p82 = scmp.ne.s32.totalorder %s70, %s71
    %p83 = scmp.eq.s32.totalorder %s19, 1
    %p84 = por %p82, %p83
    %p86 = scmp.ne.s32.totalorder %s71, %s85
    %p87 = scmp.eq.s32.totalorder %s19, 0
    %p88 = por %p86, %p87
    %s90 = sadd.s32 %s89, 1
    %p93 = scmp.eq.s32.totalorder %s13, 1
    %p94 = scmp.ne.s32.totalorder %s89, %s91
    %p95 = scmp.eq.s32.totalorder %s13, 0
    %p96 = por %p94, %p95
    %p97 = scmp.ne.s32.totalorder %s89, %s91
    %p98 = scmp.eq.s32.totalorder %s18, 1
    %p99 = por %p97, %p98
    %p100 = scmp.ne.s32.totalorder %s91, %s92
    %p101 = scmp.eq.s32.totalorder %s18, 0
    %p102 = por %p100, %p101
    %p103 = scmp.ne.s32.totalorder %s91, %s92
    %p104 = scmp.eq.s32.totalorder %s19, 1
    %p105 = por %p103, %p104
    %p107 = scmp.ne.s32.totalorder %s92, %s106
    %p108 = scmp.eq.s32.totalorder %s19, 0
    %p109 = por %p107, %p108
    %s111 = sadd.s32 %s110, 1
    %p114 = scmp.eq.s32.totalorder %s13, 1
    %p115 = scmp.ne.s32.totalorder %s110, %s112
    %p116 = scmp.eq.s32.totalorder %s13, 0
    %p117 = por %p115, %p116
    %p118 = scmp.ne.s32.totalorder %s110, %s112
    %p119 = scmp.eq.s32.totalorder %s18, 1
    %p120 = por %p118, %p119
    %p121 = scmp.ne.s32.totalorder %s112, %s113
    %p122 = scmp.eq.s32.totalorder %s18, 0
    %p123 = por %p121, %p122
    %p124 = scmp.ne.s32.totalorder %s112, %s113
    %p125 = scmp.eq.s32.totalorder %s19, 1
    %p126 = por %p124, %p125
    %p128 = scmp.ne.s32.totalorder %s113, %s127
    %p129 = scmp.eq.s32.totalorder %s19, 0
    %p130 = por %p128, %p129
    %s132 = sadd.s32 %s131, 1
    %p135 = scmp.eq.s32.totalorder %s13, 1
    %p136 = scmp.ne.s32.totalorder %s131, %s133
    %p137 = scmp.eq.s32.totalorder %s13, 0
    %p138 = por %p136, %p137
    %p139 = scmp.ne.s32.totalorder %s131, %s133
    %p140 = scmp.eq.s32.totalorder %s18, 1
    %p141 = por %p139, %p140
    %p142 = scmp.ne.s32.totalorder %s133, %s134
    %p143 = scmp.eq.s32.totalorder %s18, 0
    %p144 = por %p142, %p143
    %p145 = scmp.ne.s32.totalorder %s133, %s134
    %p146 = scmp.eq.s32.totalorder %s19, 1
    %p147 = por %p145, %p146
    %p149 = scmp.ne.s32.totalorder %s134, %s148
    %p150 = scmp.eq.s32.totalorder %s19, 0
    %p151 = por %p149, %p150
    %s153 = sadd.s32 %s152, 1
    %p156 = scmp.eq.s32.totalorder %s13, 1
    %p157 = scmp.ne.s32.totalorder %s152, %s154
    %p158 = scmp.eq.s32.totalorder %s13, 0
    %p159 = por %p157, %p158
    %p160 = scmp.ne.s32.totalorder %s152, %s154
    %p161 = scmp.eq.s32.totalorder %s18, 1
    %p162 = por %p160, %p161
    %p163 = scmp.ne.s32.totalorder %s154, %s155
    %p164 = scmp.eq.s32.totalorder %s18, 0
    %p165 = por %p163, %p164
    %p166 = scmp.ne.s32.totalorder %s154, %s155
    %p167 = scmp.eq.s32.totalorder %s19, 1
    %p168 = por %p166, %p167
    %p170 = scmp.ne.s32.totalorder %s155, %s169
    %p171 = scmp.eq.s32.totalorder %s19, 0
    %p172 = por %p170, %p171
    %s173 = ssub.s32 %s13, %s20
    %p174 = scmp.eq.s32.totalorder %s173, 0
    %s176 = sadd.s32 %s175, 1
    %s177 = scalar_select %p174, %s175, %s176
    %p180 = pneg %p174
    %p181 = scmp.eq.s32.totalorder %s13, 1
    %p182 = por %p180, %p181
    %p183 = scmp.ne.s32.totalorder %s175, %s178
    %p184 = scmp.eq.s32.totalorder %s13, 0
    %p185 = por %p183, %p184
    %p186 = scmp.ne.s32.totalorder %s175, %s178
    %p187 = scmp.eq.s32.totalorder %s18, 1
    %p188 = por %p186, %p187
    %p189 = scmp.ne.s32.totalorder %s178, %s179
    %p190 = scmp.eq.s32.totalorder %s18, 0
    %p191 = por %p189, %p190
    %p192 = scmp.ne.s32.totalorder %s178, %s179
    %p193 = scmp.eq.s32.totalorder %s19, 1
    %p194 = por %p192, %p193
    %p196 = scmp.ne.s32.totalorder %s179, %s195
    %p197 = scmp.eq.s32.totalorder %s19, 0
    %p198 = por %p196, %p197
    %p199 = scmp.le.s32.totalorder 1, %s13
    %p200 = scmp.lt.s32.totalorder %s13, 3
    %p201 = pnand %p199, %p200
    %p202 = pneg %p201
    // Predicated region
    $region9: #{mlp_forward.1} parent=5 // pred_check
      _
    $region10: #{mlp_forward.1} parent=5 // pred_check_branch
      %204 = sbr.rel (%p201) target = $region12
    $region11: #{mlp_forward.1} parent=5 // pred_region
      %s205 = ssub.s32 %s13, 1
      // Predicated region
      $region13: #{mlp_forward.1} parent=11 // pred_check
        %p206 = pneg %p60
      $region14: #{mlp_forward.1} parent=11 // pred_check_branch
        %208 = sbr.rel (%p206) target = $region16
      $region15: #{mlp_forward.1} parent=11 // pred_region
        _
      $region16: #{mlp_forward.1} parent=11 // pred_fallthru
        _
      // Predicated region
      $region17: #{mlp_forward.1} parent=11 // pred_check
        %p209 = pneg %p81
      $region18: #{mlp_forward.1} parent=11 // pred_check_branch
        %211 = sbr.rel (%p209) target = $region20
      $region19: #{mlp_forward.1} parent=11 // pred_region
        _
      $region20: #{mlp_forward.1} parent=11 // pred_fallthru
        _
      // Predicated region
      $region21: #{mlp_forward.1} parent=11 // pred_check
        %p212 = pneg %p102
      $region22: #{mlp_forward.1} parent=11 // pred_check_branch
        %214 = sbr.rel (%p212) target = $region24
      $region23: #{mlp_forward.1} parent=11 // pred_region
        _
      $region24: #{mlp_forward.1} parent=11 // pred_fallthru
        _
      // Predicated region
      $region25: #{mlp_forward.1} parent=11 // pred_check
        %p215 = pneg %p123
      $region26: #{mlp_forward.1} parent=11 // pred_check_branch
        %217 = sbr.rel (%p215) target = $region28
      $region27: #{mlp_forward.1} parent=11 // pred_region
        _
      $region28: #{mlp_forward.1} parent=11 // pred_fallthru
        _
      // Predicated region
      $region29: #{mlp_forward.1} parent=11 // pred_check
        %p218 = pneg %p144
      $region30: #{mlp_forward.1} parent=11 // pred_check_branch
        %220 = sbr.rel (%p218) target = $region32
      $region31: #{mlp_forward.1} parent=11 // pred_region
        _
      $region32: #{mlp_forward.1} parent=11 // pred_fallthru
        _
      // Predicated region
      $region33: #{mlp_forward.1} parent=11 // pred_check
        %p221 = pneg %p165
      $region34: #{mlp_forward.1} parent=11 // pred_check_branch
        %223 = sbr.rel (%p221) target = $region36
      $region35: #{mlp_forward.1} parent=11 // pred_region
        _
      $region36: #{mlp_forward.1} parent=11 // pred_fallthru
        _
    $region12: #{mlp_forward.1} parent=5 // pred_fallthru
      _
    %p224 = scmp.lt.s32.totalorder %s13, 2
    // Predicated region
    $region37: #{mlp_forward.1} parent=5 // pred_check
      %p225 = pneg %p224
    $region38: #{mlp_forward.1} parent=5 // pred_check_branch
      %227 = sbr.rel (%p225) target = $region40
    $region39: #{mlp_forward.1} parent=5 // pred_region
      // Predicated region
      $region41: #{mlp_forward.1} parent=39 // pred_check
        %p228 = pneg %p33
      $region42: #{mlp_forward.1} parent=39 // pred_check_branch
        %230 = sbr.rel (%p228) target = $region44
      $region43: #{mlp_forward.1} parent=39 // pred_region
        %p231 = scmp.lt.s32.totalorder %s13, 1
        %s232 = scalar_select %p231, %s13, 1
        %s233 = smul.addr %s232, 20
        %s234 = smul.addr %s233, 4
        %s235 = scalar_lea.vmem %s0, %s234
      $region44: #{mlp_forward.1} parent=39 // pred_fallthru
        _
    $region40: #{mlp_forward.1} parent=5 // pred_fallthru
      _
    %p236 = scmp.le.s32.totalorder 1, %s13
    %p237 = scmp.lt.s32.totalorder %s13, 3
    %p238 = pnand %p236, %p237
    %p239 = pneg %p238
    // Predicated region
    $region45: #{mlp_forward.1} parent=5 // pred_check
      _
    $region46: #{mlp_forward.1} parent=5 // pred_check_branch
      %241 = sbr.rel (%p238) target = $region48
    $region47: #{mlp_forward.1} parent=5 // pred_region
      %s242 = ssub.s32 %s13, 1
      %p243 = scmp.lt.s32.totalorder %s18, 1
      %s244 = scalar_select %p243, %s18, 1
      %s245 = smul.addr %s244, 20
      %s246 = smul.addr %s245, 4
      %s247 = scalar_lea.vmem %s0, %s246
      %p248 = pneg %p39
      %p249 = pneg %p36
      %p250 = pneg %p60
      %p251 = pneg %p57
      %p252 = pneg %p81
      %p253 = pneg %p78
      %p254 = pneg %p102
      %p255 = pneg %p99
      %p256 = pneg %p123
      %p257 = pneg %p120
      %p258 = pneg %p144
      %p259 = pneg %p141
      %p260 = pneg %p165
      %p261 = pneg %p162
      %p262 = pneg %p191
      %p263 = pneg %p188
      %p264 = scmp.lt.s32.totalorder %s18, 1
      %s265 = scalar_select %p264, %s18, 1
      %s266 = smul.addr %s265, 12
      %s267 = smul.addr %s266, 8
      %s268 = scalar_lea.vmem %s7, %s267
      %p269 = scmp.lt.s32.totalorder %s18, 1
      %s270 = scalar_select %p269, %s18, 1
      %s271 = smul.addr %s270, 20
      %s272 = smul.addr %s271, 4
      %s273 = scalar_lea.vmem %s0, %s272
      %p274 = scmp.lt.s32.totalorder %s18, 1
      %s275 = scalar_select %p274, %s18, 1
      %s276 = smul.addr %s275, 12
      %s277 = smul.addr %s276, 8
      %s278 = scalar_lea.vmem %s7, %s277
      %v280 = vld [vmem:[%s273] sm:$0xff]
      %v281 = vld [vmem:[%s273 + $0x8] sm:$0xff]
      %v282 = vld [vmem:[%s273 + $0x14] sm:$0xff]
      %v283 = vld [vmem:[%s273 + $0x1c] sm:$0xff]
      %v284 = vld [vmem:[%s273 + $0x28] sm:$0xff]
      %v285 = vld [vmem:[%s273 + $0x30] sm:$0xff]
      %v286 = vld [vmem:[%s273 + $0x3c] sm:$0xff]
      %v287 = vld [vmem:[%s273 + $0x44] sm:$0xff]
      %v296 = vunpack.c.l.b16 %v280
      %v297 = vunpack.c.h.b16 %v280
      %v298 = vunpack.c.l.b16 %v281
      %v299 = vunpack.c.h.b16 %v281
      %v300 = vunpack.c.l.b16 %v282
      %v301 = vunpack.c.h.b16 %v282
      %v302 = vunpack.c.l.b16 %v283
      %v303 = vunpack.c.h.b16 %v283
      %v304 = vunpack.c.l.b16 %v284
      %v305 = vunpack.c.h.b16 %v284
      %v306 = vunpack.c.l.b16 %v285
      %v307 = vunpack.c.h.b16 %v285
      %v308 = vunpack.c.l.b16 %v286
      %v309 = vunpack.c.h.b16 %v286
      %v310 = vunpack.c.l.b16 %v287
      %v311 = vunpack.c.h.b16 %v287
      %v312 = vpack.c.b16 %v300, %v296
      %v313 = vpack.c.b16 %v301, %v297
      %v314 = vpack.c.b16 %v302, %v298
      %v315 = vpack.c.b16 %v303, %v299
      %v316 = vpack.c.b16 %v308, %v304
      %v317 = vpack.c.b16 %v309, %v305
      %v318 = vpack.c.b16 %v310, %v306
      %v319 = vpack.c.b16 %v311, %v307
      %320 = vrot.lane.b32.xlu0 %v312, 74
      %v321 = vpop.permute.xlu0 %320
      %322 = vrot.lane.b32.xlu0 %v313, 74
      %v323 = vpop.permute.xlu0 %322
      %324 = vrot.lane.b32.xlu0 %v314, 74
      %v325 = vpop.permute.xlu0 %324
      %326 = vrot.lane.b32.xlu0 %v315, 74
      %v327 = vpop.permute.xlu0 %326
      %328 = vrot.lane.b32.xlu0 %v316, 74
      %v329 = vpop.permute.xlu0 %328
      %330 = vrot.lane.b32.xlu0 %v317, 74
      %v331 = vpop.permute.xlu0 %330
      %332 = vrot.lane.b32.xlu0 %v318, 74
      %v333 = vpop.permute.xlu0 %332
      %334 = vrot.lane.b32.xlu0 %v319, 74
      %v335 = vpop.permute.xlu0 %334
      %vm336 = vcmask 605184
      %v337 = vsel %vm336, %v321, %v323
      %v338 = vsel %vm336, %v323, %v325
      %v339 = vsel %vm336, %v325, %v327
      %v340 = vsel %vm336, %v329, %v331
      %v341 = vsel %vm336, %v331, %v333
      %v342 = vsel %vm336, %v333, %v335
      %349 = vst [vmem:[#allocation2] sm:$0xff] %v337
      %350 = vst [vmem:[#allocation2 + $0x8] sm:$0xff] %v338
      %351 = vst [vmem:[#allocation2 + $0x10] sm:$0xff] %v339
      %352 = vst [vmem:[#allocation2 + $0x18] sm:$0xff] %v340
      %353 = vst [vmem:[#allocation2 + $0x20] sm:$0xff] %v341
      %354 = vst [vmem:[#allocation2 + $0x28] sm:$0xff] %v342
      %v355 = vld [vmem:[%s273] sm:$0xff]
      %v356 = vld [vmem:[%s273 + $0x8] sm:$0xff]
      %v357 = vld [vmem:[%s273 + $0x14] sm:$0xff]
      %v358 = vld [vmem:[%s273 + $0x1c] sm:$0xff]
      %v359 = vld [vmem:[%s273 + $0x28] sm:$0xff]
      %v360 = vld [vmem:[%s273 + $0x30] sm:$0xff]
      %v361 = vld [vmem:[%s273 + $0x3c] sm:$0xff]
      %v362 = vld [vmem:[%s273 + $0x44] sm:$0xff]
      %v371 = vunpack.c.l.b16 %v355
      %v372 = vunpack.c.h.b16 %v355
      %v373 = vunpack.c.l.b16 %v356
      %v374 = vunpack.c.h.b16 %v356
      %v375 = vunpack.c.l.b16 %v357
      %v376 = vunpack.c.h.b16 %v357
      %v377 = vunpack.c.l.b16 %v358
      %v378 = vunpack.c.h.b16 %v358
      %v379 = vunpack.c.l.b16 %v359
      %v380 = vunpack.c.h.b16 %v359
      %v381 = vunpack.c.l.b16 %v360
      %v382 = vunpack.c.h.b16 %v360
      %v383 = vunpack.c.l.b16 %v361
      %v384 = vunpack.c.h.b16 %v361
      %v385 = vunpack.c.l.b16 %v362
      %v386 = vunpack.c.h.b16 %v362
      %v387 = vpack.c.b16 %v375, %v371
      %v388 = vpack.c.b16 %v376, %v372
      %v389 = vpack.c.b16 %v377, %v373
      %v390 = vpack.c.b16 %v378, %v374
      %v391 = vpack.c.b16 %v383, %v379
      %v392 = vpack.c.b16 %v384, %v380
      %v393 = vpack.c.b16 %v385, %v381
      %v394 = vpack.c.b16 %v386, %v382
      %395 = vrot.lane.b32.xlu0 %v387, 72
      %v396 = vpop.permute.xlu0 %395
      %397 = vrot.lane.b32.xlu0 %v388, 72
      %v398 = vpop.permute.xlu0 %397
      %399 = vrot.lane.b32.xlu0 %v389, 72
      %v400 = vpop.permute.xlu0 %399
      %401 = vrot.lane.b32.xlu0 %v390, 72
      %v402 = vpop.permute.xlu0 %401
      %403 = vrot.lane.b32.xlu0 %v391, 72
      %v404 = vpop.permute.xlu0 %403
      %405 = vrot.lane.b32.xlu0 %v392, 72
      %v406 = vpop.permute.xlu0 %405
      %407 = vrot.lane.b32.xlu0 %v393, 72
      %v408 = vpop.permute.xlu0 %407
      %409 = vrot.lane.b32.xlu0 %v394, 72
      %v410 = vpop.permute.xlu0 %409
      %vm411 = vcmask 588800
      %v412 = vsel %vm411, %v396, %v398
      %v413 = vsel %vm411, %v398, %v400
      %v414 = vsel %vm411, %v400, %v402
      %v415 = vsel %vm411, %v404, %v406
      %v416 = vsel %vm411, %v406, %v408
      %v417 = vsel %vm411, %v408, %v410
      %424 = vst [vmem:[#allocation2 + $0x30] sm:$0xff] %v412
      %425 = vst [vmem:[#allocation2 + $0x38] sm:$0xff] %v413
      %426 = vst [vmem:[#allocation2 + $0x40] sm:$0xff] %v414
      %427 = vst [vmem:[#allocation2 + $0x48] sm:$0xff] %v415
      %428 = vst [vmem:[#allocation2 + $0x50] sm:$0xff] %v416
      %429 = vst [vmem:[#allocation2 + $0x58] sm:$0xff] %v417
      %v430 = vld [vmem:[%s273] sm:$0xff]
      %v431 = vld [vmem:[%s273 + $0x8] sm:$0xff]
      %v432 = vld [vmem:[%s273 + $0x14] sm:$0xff]
      %v433 = vld [vmem:[%s273 + $0x1c] sm:$0xff]
      %v434 = vld [vmem:[%s273 + $0x28] sm:$0xff]
      %v435 = vld [vmem:[%s273 + $0x30] sm:$0xff]
      %v436 = vld [vmem:[%s273 + $0x3c] sm:$0xff]
      %v437 = vld [vmem:[%s273 + $0x44] sm:$0xff]
      %v446 = vunpack.c.l.b16 %v430
      %v447 = vunpack.c.h.b16 %v430
      %v448 = vunpack.c.l.b16 %v431
      %v449 = vunpack.c.h.b16 %v431
      %v450 = vunpack.c.l.b16 %v432
      %v451 = vunpack.c.h.b16 %v432
      %v452 = vunpack.c.l.b16 %v433
      %v453 = vunpack.c.h.b16 %v433
      %v454 = vunpack.c.l.b16 %v434
      %v455 = vunpack.c.h.b16 %v434
      %v456 = vunpack.c.l.b16 %v435
      %v457 = vunpack.c.h.b16 %v435
      %v458 = vunpack.c.l.b16 %v436
      %v459 = vunpack.c.h.b16 %v436
      %v460 = vunpack.c.l.b16 %v437
      %v461 = vunpack.c.h.b16 %v437
      %v462 = vpack.c.b16 %v450, %v446
      %v463 = vpack.c.b16 %v451, %v447
      %v464 = vpack.c.b16 %v452, %v448
      %v465 = vpack.c.b16 %v453, %v449
      %v466 = vpack.c.b16 %v458, %v454
      %v467 = vpack.c.b16 %v459, %v455
      %v468 = vpack.c.b16 %v460, %v456
      %v469 = vpack.c.b16 %v461, %v457
      %470 = vrot.lane.b32.xlu0 %v462, 70
      %v471 = vpop.permute.xlu0 %470
      %472 = vrot.lane.b32.xlu0 %v463, 70
      %v473 = vpop.permute.xlu0 %472
      %474 = vrot.lane.b32.xlu0 %v464, 70
      %v475 = vpop.permute.xlu0 %474
      %476 = vrot.lane.b32.xlu0 %v465, 70
      %v477 = vpop.permute.xlu0 %476
      %478 = vrot.lane.b32.xlu0 %v466, 70
      %v479 = vpop.permute.xlu0 %478
      %480 = vrot.lane.b32.xlu0 %v467, 70
      %v481 = vpop.permute.xlu0 %480
      %482 = vrot.lane.b32.xlu0 %v468, 70
      %v483 = vpop.permute.xlu0 %482
      %484 = vrot.lane.b32.xlu0 %v469, 70
      %v485 = vpop.permute.xlu0 %484
      %vm486 = vcmask 572416
      %v487 = vsel %vm486, %v471, %v473
      %v488 = vsel %vm486, %v473, %v475
      %v489 = vsel %vm486, %v475, %v477
      %v490 = vsel %vm486, %v479, %v481
      %v491 = vsel %vm486, %v481, %v483
      %v492 = vsel %vm486, %v483, %v485
      %499 = vst [vmem:[#allocation2 + $0x60] sm:$0xff] %v487
      %500 = vst [vmem:[#allocation2 + $0x68] sm:$0xff] %v488
      %501 = vst [vmem:[#allocation2 + $0x70] sm:$0xff] %v489
      %502 = vst [vmem:[#allocation2 + $0x78] sm:$0xff] %v490
      %503 = vst [vmem:[#allocation2 + $0x80] sm:$0xff] %v491
      %504 = vst [vmem:[#allocation2 + $0x88] sm:$0xff] %v492
      %v505 = vld [vmem:[%s273] sm:$0xff]
      %v506 = vld [vmem:[%s273 + $0x8] sm:$0xff]
      %v507 = vld [vmem:[%s273 + $0x14] sm:$0xff]
      %v508 = vld [vmem:[%s273 + $0x1c] sm:$0xff]
      %v509 = vld [vmem:[%s273 + $0x28] sm:$0xff]
      %v510 = vld [vmem:[%s273 + $0x30] sm:$0xff]
      %v511 = vld [vmem:[%s273 + $0x3c] sm:$0xff]
      %v512 = vld [vmem:[%s273 + $0x44] sm:$0xff]
      %v521 = vunpack.c.l.b16 %v505
      %v522 = vunpack.c.h.b16 %v505
      %v523 = vunpack.c.l.b16 %v506
      %v524 = vunpack.c.h.b16 %v506
      %v525 = vunpack.c.l.b16 %v507
      %v526 = vunpack.c.h.b16 %v507
      %v527 = vunpack.c.l.b16 %v508
      %v528 = vunpack.c.h.b16 %v508
      %v529 = vunpack.c.l.b16 %v509
      %v530 = vunpack.c.h.b16 %v509
      %v531 = vunpack.c.l.b16 %v510
      %v532 = vunpack.c.h.b16 %v510
      %v533 = vunpack.c.l.b16 %v511
      %v534 = vunpack.c.h.b16 %v511
      %v535 = vunpack.c.l.b16 %v512
      %v536 = vunpack.c.h.b16 %v512
      %v537 = vpack.c.b16 %v525, %v521
      %v538 = vpack.c.b16 %v526, %v522
      %v539 = vpack.c.b16 %v527, %v523
      %v540 = vpack.c.b16 %v528, %v524
      %v541 = vpack.c.b16 %v533, %v529
      %v542 = vpack.c.b16 %v534, %v530
      %v543 = vpack.c.b16 %v535, %v531
      %v544 = vpack.c.b16 %v536, %v532
      %545 = vrot.lane.b32.xlu0 %v537, 26
      %v546 = vpop.permute.xlu0 %545
      %547 = vrot.lane.b32.xlu0 %v538, 26
      %v548 = vpop.permute.xlu0 %547
      %549 = vrot.lane.b32.xlu0 %v539, 26
      %v550 = vpop.permute.xlu0 %549
      %551 = vrot.lane.b32.xlu0 %v540, 26
      %v552 = vpop.permute.xlu0 %551
      %553 = vrot.lane.b32.xlu0 %v541, 26
      %v554 = vpop.permute.xlu0 %553
      %555 = vrot.lane.b32.xlu0 %v542, 26
      %v556 = vpop.permute.xlu0 %555
      %557 = vrot.lane.b32.xlu0 %v543, 26
      %v558 = vpop.permute.xlu0 %557
      %559 = vrot.lane.b32.xlu0 %v544, 26
      %v560 = vpop.permute.xlu0 %559
      %vm561 = vcmask 211968
      %v562 = vsel %vm561, %v546, %v548
      %v563 = vsel %vm561, %v548, %v550
      %v564 = vsel %vm561, %v550, %v552
      %v565 = vsel %vm561, %v554, %v556
      %v566 = vsel %vm561, %v556, %v558
      %v567 = vsel %vm561, %v558, %v560
      %574 = vst [vmem:[#allocation2 + $0x90] sm:$0xff] %v562
      %575 = vst [vmem:[#allocation2 + $0x98] sm:$0xff] %v563
      %576 = vst [vmem:[#allocation2 + $0xa0] sm:$0xff] %v564
      %577 = vst [vmem:[#allocation2 + $0xa8] sm:$0xff] %v565
      %578 = vst [vmem:[#allocation2 + $0xb0] sm:$0xff] %v566
      %579 = vst [vmem:[#allocation2 + $0xb8] sm:$0xff] %v567
      %v580 = vld [vmem:[%s273] sm:$0xff]
      %v581 = vld [vmem:[%s273 + $0x8] sm:$0xff]
      %v582 = vld [vmem:[%s273 + $0x14] sm:$0xff]
      %v583 = vld [vmem:[%s273 + $0x1c] sm:$0xff]
      %v584 = vld [vmem:[%s273 + $0x28] sm:$0xff]
      %v585 = vld [vmem:[%s273 + $0x30] sm:$0xff]
      %v586 = vld [vmem:[%s273 + $0x3c] sm:$0xff]
      %v587 = vld [vmem:[%s273 + $0x44] sm:$0xff]
      %v596 = vunpack.c.l.b16 %v580
      %v597 = vunpack.c.h.b16 %v580
      %v598 = vunpack.c.l.b16 %v581
      %v599 = vunpack.c.h.b16 %v581
      %v600 = vunpack.c.l.b16 %v582
      %v601 = vunpack.c.h.b16 %v582
      %v602 = vunpack.c.l.b16 %v583
      %v603 = vunpack.c.h.b16 %v583
      %v604 = vunpack.c.l.b16 %v584
      %v605 = vunpack.c.h.b16 %v584
      %v606 = vunpack.c.l.b16 %v585
      %v607 = vunpack.c.h.b16 %v585
      %v608 = vunpack.c.l.b16 %v586
      %v609 = vunpack.c.h.b16 %v586
      %v610 = vunpack.c.l.b16 %v587
      %v611 = vunpack.c.h.b16 %v587
      %v612 = vpack.c.b16 %v600, %v596
      %v613 = vpack.c.b16 %v601, %v597
      %v614 = vpack.c.b16 %v602, %v598
      %v615 = vpack.c.b16 %v603, %v599
      %v616 = vpack.c.b16 %v608, %v604
      %v617 = vpack.c.b16 %v609, %v605
      %v618 = vpack.c.b16 %v610, %v606
      %v619 = vpack.c.b16 %v611, %v607
      %620 = vrot.lane.b32.xlu0 %v612, 24
      %v621 = vpop.permute.xlu0 %620
      %622 = vrot.lane.b32.xlu0 %v613, 24
      %v623 = vpop.permute.xlu0 %622
      %624 = vrot.lane.b32.xlu0 %v614, 24
      %v625 = vpop.permute.xlu0 %624
      %626 = vrot.lane.b32.xlu0 %v615, 24
      %v627 = vpop.permute.xlu0 %626
      %628 = vrot.lane.b32.xlu0 %v616, 24
      %v629 = vpop.permute.xlu0 %628
      %630 = vrot.lane.b32.xlu0 %v617, 24
      %v631 = vpop.permute.xlu0 %630
      %632 = vrot.lane.b32.xlu0 %v618, 24
      %v633 = vpop.permute.xlu0 %632
      %634 = vrot.lane.b32.xlu0 %v619, 24
      %v635 = vpop.permute.xlu0 %634
      %vm636 = vcmask 195584
      %v637 = vsel %vm636, %v621, %v623
      %v638 = vsel %vm636, %v623, %v625
      %v639 = vsel %vm636, %v625, %v627
      %v640 = vsel %vm636, %v629, %v631
      %v641 = vsel %vm636, %v631, %v633
      %v642 = vsel %vm636, %v633, %v635
      %649 = vst [vmem:[#allocation2 + $0xc0] sm:$0xff] %v637
      %650 = vst [vmem:[#allocation2 + $0xc8] sm:$0xff] %v638
      %651 = vst [vmem:[#allocation2 + $0xd0] sm:$0xff] %v639
      %652 = vst [vmem:[#allocation2 + $0xd8] sm:$0xff] %v640
      %653 = vst [vmem:[#allocation2 + $0xe0] sm:$0xff] %v641
      %654 = vst [vmem:[#allocation2 + $0xe8] sm:$0xff] %v642
      %v655 = vld [vmem:[%s273] sm:$0xff]
      %v656 = vld [vmem:[%s273 + $0x8] sm:$0xff]
      %v657 = vld [vmem:[%s273 + $0x14] sm:$0xff]
      %v658 = vld [vmem:[%s273 + $0x1c] sm:$0xff]
      %v659 = vld [vmem:[%s273 + $0x28] sm:$0xff]
      %v660 = vld [vmem:[%s273 + $0x30] sm:$0xff]
      %v661 = vld [vmem:[%s273 + $0x3c] sm:$0xff]
      %v662 = vld [vmem:[%s273 + $0x44] sm:$0xff]
      %v671 = vunpack.c.l.b16 %v655
      %v672 = vunpack.c.h.b16 %v655
      %v673 = vunpack.c.l.b16 %v656
      %v674 = vunpack.c.h.b16 %v656
      %v675 = vunpack.c.l.b16 %v657
      %v676 = vunpack.c.h.b16 %v657
      %v677 = vunpack.c.l.b16 %v658
      %v678 = vunpack.c.h.b16 %v658
      %v679 = vunpack.c.l.b16 %v659
      %v680 = vunpack.c.h.b16 %v659
      %v681 = vunpack.c.l.b16 %v660
      %v682 = vunpack.c.h.b16 %v660
      %v683 = vunpack.c.l.b16 %v661
      %v684 = vunpack.c.h.b16 %v661
      %v685 = vunpack.c.l.b16 %v662
      %v686 = vunpack.c.h.b16 %v662
      %v687 = vpack.c.b16 %v675, %v671
      %v688 = vpack.c.b16 %v676, %v672
      %v689 = vpack.c.b16 %v677, %v673
      %v690 = vpack.c.b16 %v678, %v674
      %v691 = vpack.c.b16 %v683, %v679
      %v692 = vpack.c.b16 %v684, %v680
      %v693 = vpack.c.b16 %v685, %v681
      %v694 = vpack.c.b16 %v686, %v682
      %695 = vrot.lane.b32.xlu0 %v687, 22
      %v696 = vpop.permute.xlu0 %695
      %697 = vrot.lane.b32.xlu0 %v688, 22
      %v698 = vpop.permute.xlu0 %697
      %699 = vrot.lane.b32.xlu0 %v689, 22
      %v700 = vpop.permute.xlu0 %699
      %701 = vrot.lane.b32.xlu0 %v690, 22
      %v702 = vpop.permute.xlu0 %701
      %703 = vrot.lane.b32.xlu0 %v691, 22
      %v704 = vpop.permute.xlu0 %703
      %705 = vrot.lane.b32.xlu0 %v692, 22
      %v706 = vpop.permute.xlu0 %705
      %707 = vrot.lane.b32.xlu0 %v693, 22
      %v708 = vpop.permute.xlu0 %707
      %709 = vrot.lane.b32.xlu0 %v694, 22
      %v710 = vpop.permute.xlu0 %709
      %vm711 = vcmask 179200
      %v712 = vsel %vm711, %v696, %v698
      %v713 = vsel %vm711, %v698, %v700
      %v714 = vsel %vm711, %v700, %v702
      %v715 = vsel %vm711, %v704, %v706
      %v716 = vsel %vm711, %v706, %v708
      %v717 = vsel %vm711, %v708, %v710
      %724 = vst [vmem:[#allocation2 + $0xf0] sm:$0xff] %v712
      %725 = vst [vmem:[#allocation2 + $0xf8] sm:$0xff] %v713
      %726 = vst [vmem:[#allocation2 + $0x100] sm:$0xff] %v714
      %727 = vst [vmem:[#allocation2 + $0x108] sm:$0xff] %v715
      %728 = vst [vmem:[#allocation2 + $0x110] sm:$0xff] %v716
      %729 = vst [vmem:[#allocation2 + $0x118] sm:$0xff] %v717
      %v730 = vld [vmem:[%s273 + $0x4] sm:$0xff]
      %v731 = vld [vmem:[%s273 + $0xc] sm:$0xff]
      %v732 = vld [vmem:[%s273 + $0x18] sm:$0xff]
      %v733 = vld [vmem:[%s273 + $0x20] sm:$0xff]
      %v734 = vld [vmem:[%s273 + $0x2c] sm:$0xff]
      %v735 = vld [vmem:[%s273 + $0x34] sm:$0xff]
      %v736 = vld [vmem:[%s273 + $0x40] sm:$0xff]
      %v737 = vld [vmem:[%s273 + $0x48] sm:$0xff]
      %v746 = vunpack.c.l.b16 %v730
      %v747 = vunpack.c.h.b16 %v730
      %v748 = vunpack.c.l.b16 %v731
      %v749 = vunpack.c.h.b16 %v731
      %v750 = vunpack.c.l.b16 %v732
      %v751 = vunpack.c.h.b16 %v732
      %v752 = vunpack.c.l.b16 %v733
      %v753 = vunpack.c.h.b16 %v733
      %v754 = vunpack.c.l.b16 %v734
      %v755 = vunpack.c.h.b16 %v734
      %v756 = vunpack.c.l.b16 %v735
      %v757 = vunpack.c.h.b16 %v735
      %v758 = vunpack.c.l.b16 %v736
      %v759 = vunpack.c.h.b16 %v736
      %v760 = vunpack.c.l.b16 %v737
      %v761 = vunpack.c.h.b16 %v737
      %v762 = vpack.c.b16 %v750, %v746
      %v763 = vpack.c.b16 %v751, %v747
      %v764 = vpack.c.b16 %v752, %v748
      %v765 = vpack.c.b16 %v753, %v749
      %v766 = vpack.c.b16 %v758, %v754
      %v767 = vpack.c.b16 %v759, %v755
      %v768 = vpack.c.b16 %v760, %v756
      %v769 = vpack.c.b16 %v761, %v757
      %770 = vrot.lane.b32.xlu0 %v762, 106
      %v771 = vpop.permute.xlu0 %770
      %772 = vrot.lane.b32.xlu0 %v763, 106
      %v773 = vpop.permute.xlu0 %772
      %774 = vrot.lane.b32.xlu0 %v764, 106
      %v775 = vpop.permute.xlu0 %774
      %776 = vrot.lane.b32.xlu0 %v765, 106
      %v777 = vpop.permute.xlu0 %776
      %778 = vrot.lane.b32.xlu0 %v766, 106
      %v779 = vpop.permute.xlu0 %778
      %780 = vrot.lane.b32.xlu0 %v767, 106
      %v781 = vpop.permute.xlu0 %780
      %782 = vrot.lane.b32.xlu0 %v768, 106
      %v783 = vpop.permute.xlu0 %782
      %784 = vrot.lane.b32.xlu0 %v769, 106
      %v785 = vpop.permute.xlu0 %784
      %vm786 = vcmask 867328
      %v787 = vsel %vm786, %v771, %v773
      %v788 = vsel %vm786, %v773, %v775
      %v789 = vsel %vm786, %v775, %v777
      %v790 = vsel %vm786, %v779, %v781
      %v791 = vsel %vm786, %v781, %v783
      %v792 = vsel %vm786, %v783, %v785
      %799 = vst [vmem:[#allocation2 + $0x120] sm:$0xff] %v787
      %800 = vst [vmem:[#allocation2 + $0x128] sm:$0xff] %v788
      %801 = vst [vmem:[#allocation2 + $0x130] sm:$0xff] %v789
      %802 = vst [vmem:[#allocation2 + $0x138] sm:$0xff] %v790
      %803 = vst [vmem:[#allocation2 + $0x140] sm:$0xff] %v791
      %804 = vst [vmem:[#allocation2 + $0x148] sm:$0xff] %v792
      %v805 = vld [vmem:[%s273 + $0x4] sm:$0xff]
      %v806 = vld [vmem:[%s273 + $0xc] sm:$0xff]
      %v807 = vld [vmem:[%s273 + $0x18] sm:$0xff]
      %v808 = vld [vmem:[%s273 + $0x20] sm:$0xff]
      %v809 = vld [vmem:[%s273 + $0x2c] sm:$0xff]
      %v810 = vld [vmem:[%s273 + $0x34] sm:$0xff]
      %v811 = vld [vmem:[%s273 + $0x40] sm:$0xff]
      %v812 = vld [vmem:[%s273 + $0x48] sm:$0xff]
      %v821 = vunpack.c.l.b16 %v805
      %v822 = vunpack.c.h.b16 %v805
      %v823 = vunpack.c.l.b16 %v806
      %v824 = vunpack.c.h.b16 %v806
      %v825 = vunpack.c.l.b16 %v807
      %v826 = vunpack.c.h.b16 %v807
      %v827 = vunpack.c.l.b16 %v808
      %v828 = vunpack.c.h.b16 %v808
      %v829 = vunpack.c.l.b16 %v809
      %v830 = vunpack.c.h.b16 %v809
      %v831 = vunpack.c.l.b16 %v810
      %v832 = vunpack.c.h.b16 %v810
      %v833 = vunpack.c.l.b16 %v811
      %v834 = vunpack.c.h.b16 %v811
      %v835 = vunpack.c.l.b16 %v812
      %v836 = vunpack.c.h.b16 %v812
      %v837 = vpack.c.b16 %v825, %v821
      %v838 = vpack.c.b16 %v826, %v822
      %v839 = vpack.c.b16 %v827, %v823
      %v840 = vpack.c.b16 %v828, %v824
      %v841 = vpack.c.b16 %v833, %v829
      %v842 = vpack.c.b16 %v834, %v830
      %v843 = vpack.c.b16 %v835, %v831
      %v844 = vpack.c.b16 %v836, %v832
      %845 = vrot.lane.b32.xlu0 %v837, 104
      %v846 = vpop.permute.xlu0 %845
      %847 = vrot.lane.b32.xlu0 %v838, 104
      %v848 = vpop.permute.xlu0 %847
      %849 = vrot.lane.b32.xlu0 %v839, 104
      %v850 = vpop.permute.xlu0 %849
      %851 = vrot.lane.b32.xlu0 %v840, 104
      %v852 = vpop.permute.xlu0 %851
      %853 = vrot.lane.b32.xlu0 %v841, 104
      %v854 = vpop.permute.xlu0 %853
      %855 = vrot.lane.b32.xlu0 %v842, 104
      %v856 = vpop.permute.xlu0 %855
      %857 = vrot.lane.b32.xlu0 %v843, 104
      %v858 = vpop.permute.xlu0 %857
      %859 = vrot.lane.b32.xlu0 %v844, 104
      %v860 = vpop.permute.xlu0 %859
      %vm861 = vcmask 850944
      %v862 = vsel %vm861, %v846, %v848
      %v863 = vsel %vm861, %v848, %v850
      %v864 = vsel %vm861, %v850, %v852
      %v865 = vsel %vm861, %v854, %v856
      %v866 = vsel %vm861, %v856, %v858
      %v867 = vsel %vm861, %v858, %v860
      %874 = vst [vmem:[#allocation2 + $0x150] sm:$0xff] %v862
      %875 = vst [vmem:[#allocation2 + $0x158] sm:$0xff] %v863
      %876 = vst [vmem:[#allocation2 + $0x160] sm:$0xff] %v864
      %877 = vst [vmem:[#allocation2 + $0x168] sm:$0xff] %v865
      %878 = vst [vmem:[#allocation2 + $0x170] sm:$0xff] %v866
      %879 = vst [vmem:[#allocation2 + $0x178] sm:$0xff] %v867
      %v880 = vld [vmem:[%s273 + $0x4] sm:$0xff]
      %v881 = vld [vmem:[%s273 + $0xc] sm:$0xff]
      %v882 = vld [vmem:[%s273 + $0x18] sm:$0xff]
      %v883 = vld [vmem:[%s273 + $0x20] sm:$0xff]
      %v884 = vld [vmem:[%s273 + $0x2c] sm:$0xff]
      %v885 = vld [vmem:[%s273 + $0x34] sm:$0xff]
      %v886 = vld [vmem:[%s273 + $0x40] sm:$0xff]
      %v887 = vld [vmem:[%s273 + $0x48] sm:$0xff]
      %v896 = vunpack.c.l.b16 %v880
      %v897 = vunpack.c.h.b16 %v880
      %v898 = vunpack.c.l.b16 %v881
      %v899 = vunpack.c.h.b16 %v881
      %v900 = vunpack.c.l.b16 %v882
      %v901 = vunpack.c.h.b16 %v882
      %v902 = vunpack.c.l.b16 %v883
      %v903 = vunpack.c.h.b16 %v883
      %v904 = vunpack.c.l.b16 %v884
      %v905 = vunpack.c.h.b16 %v884
      %v906 = vunpack.c.l.b16 %v885
      %v907 = vunpack.c.h.b16 %v885
      %v908 = vunpack.c.l.b16 %v886
      %v909 = vunpack.c.h.b16 %v886
      %v910 = vunpack.c.l.b16 %v887
      %v911 = vunpack.c.h.b16 %v887
      %v912 = vpack.c.b16 %v900, %v896
      %v913 = vpack.c.b16 %v901, %v897
      %v914 = vpack.c.b16 %v902, %v898
      %v915 = vpack.c.b16 %v903, %v899
      %v916 = vpack.c.b16 %v908, %v904
      %v917 = vpack.c.b16 %v909, %v905
      %v918 = vpack.c.b16 %v910, %v906
      %v919 = vpack.c.b16 %v911, %v907
      %920 = vrot.lane.b32.xlu0 %v912, 102
      %v921 = vpop.permute.xlu0 %920
      %922 = vrot.lane.b32.xlu0 %v913, 102
      %v923 = vpop.permute.xlu0 %922
      %924 = vrot.lane.b32.xlu0 %v914, 102
      %v925 = vpop.permute.xlu0 %924
      %926 = vrot.lane.b32.xlu0 %v915, 102
      %v927 = vpop.permute.xlu0 %926
      %928 = vrot.lane.b32.xlu0 %v916, 102
      %v929 = vpop.permute.xlu0 %928
      %930 = vrot.lane.b32.xlu0 %v917, 102
      %v931 = vpop.permute.xlu0 %930
      %932 = vrot.lane.b32.xlu0 %v918, 102
      %v933 = vpop.permute.xlu0 %932
      %934 = vrot.lane.b32.xlu0 %v919, 102
      %v935 = vpop.permute.xlu0 %934
      %vm936 = vcmask 834560
      %v937 = vsel %vm936, %v921, %v923
      %v938 = vsel %vm936, %v923, %v925
      %v939 = vsel %vm936, %v925, %v927
      %v940 = vsel %vm936, %v929, %v931
      %v941 = vsel %vm936, %v931, %v933
      %v942 = vsel %vm936, %v933, %v935
      %949 = vst [vmem:[#allocation2 + $0x180] sm:$0xff] %v937
      %950 = vst [vmem:[#allocation2 + $0x188] sm:$0xff] %v938
      %951 = vst [vmem:[#allocation2 + $0x190] sm:$0xff] %v939
      %952 = vst [vmem:[#allocation2 + $0x198] sm:$0xff] %v940
      %953 = vst [vmem:[#allocation2 + $0x1a0] sm:$0xff] %v941
      %954 = vst [vmem:[#allocation2 + $0x1a8] sm:$0xff] %v942
      %v955 = vld [vmem:[%s1] sm:$0xff]
      %v956 = vld [vmem:[%s1 + $0x8] sm:$0xf]
      %v957 = vld [vmem:[%s1 + $0xc] sm:$0xff]
      %v958 = vld [vmem:[%s1 + $0x14] sm:$0xf]
      %v959 = vld [vmem:[#allocation2] sm:$0xff]
      %v960 = vld [vmem:[#allocation2 + $0x8] sm:$0xff]
      %v961 = vld [vmem:[#allocation2 + $0x10] sm:$0xff]
      %v962 = vld [vmem:[#allocation2 + $0x18] sm:$0xff]
      %v963 = vld [vmem:[#allocation2 + $0x20] sm:$0xff]
      %v964 = vld [vmem:[#allocation2 + $0x28] sm:$0xff]
      %v965 = vld [vmem:[#allocation2 + $0x30] sm:$0xff]
      %v966 = vld [vmem:[#allocation2 + $0x38] sm:$0xff]
      %v967 = vld [vmem:[#allocation2 + $0x40] sm:$0xff]
      %v968 = vld [vmem:[#allocation2 + $0x48] sm:$0xff]
      %v969 = vld [vmem:[#allocation2 + $0x50] sm:$0xff]
      %v970 = vld [vmem:[#allocation2 + $0x58] sm:$0xff]
      %v971 = vld [vmem:[#allocation2 + $0x60] sm:$0xff]
      %v972 = vld [vmem:[#allocation2 + $0x68] sm:$0xff]
      %v973 = vld [vmem:[#allocation2 + $0x70] sm:$0xff]
      %v974 = vld [vmem:[#allocation2 + $0x78] sm:$0xff]
      %v975 = vld [vmem:[#allocation2 + $0x80] sm:$0xff]
      %v976 = vld [vmem:[#allocation2 + $0x88] sm:$0xff]
      %v977 = vld [vmem:[#allocation2 + $0x90] sm:$0xff]
      %v978 = vld [vmem:[#allocation2 + $0x98] sm:$0xff]
      %v979 = vld [vmem:[#allocation2 + $0xa0] sm:$0xff]
      %v980 = vld [vmem:[#allocation2 + $0xa8] sm:$0xff]
      %v981 = vld [vmem:[#allocation2 + $0xb0] sm:$0xff]
      %v982 = vld [vmem:[#allocation2 + $0xb8] sm:$0xff]
      %v983 = vld [vmem:[#allocation2 + $0xc0] sm:$0xff]
      %v984 = vld [vmem:[#allocation2 + $0xc8] sm:$0xff]
      %v985 = vld [vmem:[#allocation2 + $0xd0] sm:$0xff]
      %v986 = vld [vmem:[#allocation2 + $0xd8] sm:$0xff]
      %v987 = vld [vmem:[#allocation2 + $0xe0] sm:$0xff]
      %v988 = vld [vmem:[#allocation2 + $0xe8] sm:$0xff]
      %v989 = vld [vmem:[#allocation2 + $0xf0] sm:$0xff]
      %v990 = vld [vmem:[#allocation2 + $0xf8] sm:$0xff]
      %v991 = vld [vmem:[#allocation2 + $0x100] sm:$0xff]
      %v992 = vld [vmem:[#allocation2 + $0x108] sm:$0xff]
      %v993 = vld [vmem:[#allocation2 + $0x110] sm:$0xff]
      %v994 = vld [vmem:[#allocation2 + $0x118] sm:$0xff]
      %v995 = vld [vmem:[#allocation2 + $0x120] sm:$0xff]
      %v996 = vld [vmem:[#allocation2 + $0x128] sm:$0xff]
      %v997 = vld [vmem:[#allocation2 + $0x130] sm:$0xff]
      %v998 = vld [vmem:[#allocation2 + $0x138] sm:$0xff]
      %v999 = vld [vmem:[#allocation2 + $0x140] sm:$0xff]
      %v1000 = vld [vmem:[#allocation2 + $0x148] sm:$0xff]
      %v1001 = vld [vmem:[#allocation2 + $0x150] sm:$0xff]
      %v1002 = vld [vmem:[#allocation2 + $0x158] sm:$0xff]
      %v1003 = vld [vmem:[#allocation2 + $0x160] sm:$0xff]
      %v1004 = vld [vmem:[#allocation2 + $0x168] sm:$0xff]
      %v1005 = vld [vmem:[#allocation2 + $0x170] sm:$0xff]
      %v1006 = vld [vmem:[#allocation2 + $0x178] sm:$0xff]
      %v1007 = vld [vmem:[#allocation2 + $0x180] sm:$0xff]
      %v1008 = vld [vmem:[#allocation2 + $0x188] sm:$0xff]
      %v1009 = vld [vmem:[#allocation2 + $0x190] sm:$0xff]
      %v1010 = vld [vmem:[#allocation2 + $0x198] sm:$0xff]
      %v1011 = vld [vmem:[#allocation2 + $0x1a0] sm:$0xff]
      %v1012 = vld [vmem:[#allocation2 + $0x1a8] sm:$0xff]
      %v1017 = vunpack.c.l.b16 %v955
      %v1018 = vunpack.c.h.b16 %v955
      %v1019 = vunpack.c.l.b16 %v956
      %v1020 = vunpack.c.l.b16 %v957
      %v1021 = vunpack.c.h.b16 %v957
      %v1022 = vunpack.c.l.b16 %v958
      %v1023 = vpack.c.b16 %v1020, %v1017
      %v1024 = vpack.c.b16 %v1021, %v1018
      %v1025 = vpack.c.b16 %v1022, %v1019
      %vm1028 = vcmask 261120
      %v1030 = vsel %vm1028, %v1025, 0
      %1032 = vmatprep.subr.bf16.mxu0 %v960
      %1033 = vmatpush1.bf16.msra.mxu0 %v959
      %1034 = vmatprep.subr.bf16.mxu0 %v963
      %1035 = vmatpush1.bf16.msra.mxu0 %v962
      %1036 = vmatprep.subr.bf16.mxu0 %v966
      %1037 = vmatpush1.bf16.msra.mxu0 %v965
      %1038 = vmatprep.subr.bf16.mxu0 %v969
      %1039 = vmatpush1.bf16.msra.mxu0 %v968
      %1040 = vmatprep.subr.bf16.mxu0 %v972
      %1041 = vmatpush1.bf16.msra.mxu0 %v971
      %1042 = vmatprep.subr.bf16.mxu0 %v975
      %1043 = vmatpush1.bf16.msra.mxu0 %v974
      %1044 = vmatprep.subr.bf16.mxu0 %v978
      %1045 = vmatpush1.bf16.msra.mxu0 %v977
      %1046 = vmatprep.subr.bf16.mxu0 %v981
      %1047 = vmatpush1.bf16.msra.mxu0 %v980
      %1048 = vmatprep.subr.bf16.mxu0 %v984
      %1049 = vmatpush1.bf16.msra.mxu0 %v983
      %1050 = vmatprep.subr.bf16.mxu0 %v987
      %1051 = vmatpush1.bf16.msra.mxu0 %v986
      %1052 = vmatprep.subr.bf16.mxu0 %v990
      %1053 = vmatpush1.bf16.msra.mxu0 %v989
      %1054 = vmatprep.subr.bf16.mxu0 %v993
      %1055 = vmatpush1.bf16.msra.mxu0 %v992
      %1056 = vmatprep.subr.bf16.mxu0 %v996
      %1057 = vmatpush1.bf16.msra.mxu0 %v995
      %1058 = vmatprep.subr.bf16.mxu0 %v999
      %1059 = vmatpush1.bf16.msra.mxu0 %v998
      %1060 = vmatprep.subr.bf16.mxu0 %v1002
      %1061 = vmatpush1.bf16.msra.mxu0 %v1001
      %1062 = vmatprep.subr.bf16.mxu0 %v1005
      %1063 = vmatpush1.bf16.msra.mxu0 %v1004
      %1064 = vmatprep.mubr.bf16.mxu0 %v1024
      %1065 = vmatmul.mubr.bf16.gmra.mrb[0].mxu0 %v1023
      %v1066 = vpop.f32.mrb[0].mxu0
      %v1067 = vadd.f32 0.0, %v1066
      %v1068 = vpop.f32.mrb[0].mxu0
      %v1069 = vadd.f32 0.0, %v1068
      %v1070 = vpop.f32.mrb[0].mxu0
      %v1071 = vadd.f32 0.0, %v1070
      %v1072 = vpop.f32.mrb[0].mxu0
      %v1073 = vadd.f32 0.0, %v1072
      %1074 = vdwg.mxu0
      %1075 = vmatprep.subr.bf16.mxu0 %v1008
      %1076 = vmatpush1.bf16.msra.mxu0 %v1007
      %1077 = vmatprep.subr.bf16.mxu0 %v1011
      %1078 = vmatpush1.bf16.msra.mxu0 %v1010
      %1079 = vmatprep.subr.bf16.mxu0 0
      %1080 = vmatpush1.bf16.msra.mxu0 0
      %1081 = vmatprep.subr.bf16.mxu0 0
      %1082 = vmatpush1.bf16.msra.mxu0 0
      %1083 = vmatprep.subr.bf16.mxu0 0
      %1084 = vmatpush1.bf16.msra.mxu0 0
      %1085 = vmatprep.subr.bf16.mxu0 0
      %1086 = vmatpush1.bf16.msra.mxu0 0
      %1087 = vmatprep.subr.bf16.mxu0 0
      %1088 = vmatpush1.bf16.msra.mxu0 0
      %1089 = vmatprep.subr.bf16.mxu0 0
      %1090 = vmatpush1.bf16.msra.mxu0 0
      %1091 = vmatprep.subr.bf16.mxu0 0
      %1092 = vmatpush1.bf16.msra.mxu0 0
      %1093 = vmatprep.subr.bf16.mxu0 0
      %1094 = vmatpush1.bf16.msra.mxu0 0
      %1095 = vmatprep.subr.bf16.mxu0 0
      %1096 = vmatpush1.bf16.msra.mxu0 0
      %1097 = vmatprep.subr.bf16.mxu0 0
      %1098 = vmatpush1.bf16.msra.mxu0 0
      %1099 = vmatprep.subr.bf16.mxu0 0
      %1100 = vmatpush1.bf16.msra.mxu0 0
      %1101 = vmatprep.subr.bf16.mxu0 0
      %1102 = vmatpush1.bf16.msra.mxu0 0
      %1103 = vmatprep.subr.bf16.mxu0 0
      %1104 = vmatpush1.bf16.msra.mxu0 0
      %1105 = vmatprep.subr.bf16.mxu0 0
      %1106 = vmatpush1.bf16.msra.mxu0 0
      %1107 = vmatprep.mubr.bf16.mxu0 0
      %1108 = vmatmul.mubr.bf16.gmra.mrb[0].mxu0 %v1030
      %v1109 = vpop.f32.mrb[0].mxu0
      %v1110 = vadd.f32 %v1067, %v1109
      %v1111 = vpop.f32.mrb[0].mxu0
      %v1112 = vadd.f32 %v1069, %v1111
      %v1113 = vpop.f32.mrb[0].mxu0
      %v1114 = vadd.f32 %v1071, %v1113
      %v1115 = vpop.f32.mrb[0].mxu0
      %v1116 = vadd.f32 %v1073, %v1115
      %1117 = vdwg.mxu0
      %1118 = vmatprep.subr.bf16.mxu0 0
      %1119 = vmatpush1.bf16.msra.mxu0 %v961
      %1120 = vmatprep.subr.bf16.mxu0 0
      %1121 = vmatpush1.bf16.msra.mxu0 %v964
      %1122 = vmatprep.subr.bf16.mxu0 0
      %1123 = vmatpush1.bf16.msra.mxu0 %v967
      %1124 = vmatprep.subr.bf16.mxu0 0
      %1125 = vmatpush1.bf16.msra.mxu0 %v970
      %1126 = vmatprep.subr.bf16.mxu0 0
      %1127 = vmatpush1.bf16.msra.mxu0 %v973
      %1128 = vmatprep.subr.bf16.mxu0 0
      %1129 = vmatpush1.bf16.msra.mxu0 %v976
      %1130 = vmatprep.subr.bf16.mxu0 0
      %1131 = vmatpush1.bf16.msra.mxu0 %v979
      %1132 = vmatprep.subr.bf16.mxu0 0
      %1133 = vmatpush1.bf16.msra.mxu0 %v982
      %1134 = vmatprep.subr.bf16.mxu0 0
      %1135 = vmatpush1.bf16.msra.mxu0 %v985
      %1136 = vmatprep.subr.bf16.mxu0 0
      %1137 = vmatpush1.bf16.msra.mxu0 %v988
      %1138 = vmatprep.subr.bf16.mxu0 0
      %1139 = vmatpush1.bf16.msra.mxu0 %v991
      %1140 = vmatprep.subr.bf16.mxu0 0
      %1141 = vmatpush1.bf16.msra.mxu0 %v994
      %1142 = vmatprep.subr.bf16.mxu0 0
      %1143 = vmatpush1.bf16.msra.mxu0 %v997
      %1144 = vmatprep.subr.bf16.mxu0 0
      %1145 = vmatpush1.bf16.msra.mxu0 %v1000
      %1146 = vmatprep.subr.bf16.mxu0 0
      %1147 = vmatpush1.bf16.msra.mxu0 %v1003
      %1148 = vmatprep.subr.bf16.mxu0 0
      %1149 = vmatpush1.bf16.msra.mxu0 %v1006
      %1150 = vmatprep.mubr.bf16.mxu0 %v1024
      %1151 = vmatmul.mubr.bf16.gmra.mrb[0].mxu0 %v1023
      %v1152 = vpop.f32.mrb[0].mxu0
      %v1153 = vadd.f32 0.0, %v1152
      %v1154 = vpop.f32.mrb[0].mxu0
      %v1155 = vpop.f32.mrb[0].mxu0
      %v1156 = vadd.f32 0.0, %v1155
      %v1157 = vpop.f32.mrb[0].mxu0
      %1158 = vdwg.mxu0
      %1159 = vmatprep.subr.bf16.mxu0 0
      %1160 = vmatpush1.bf16.msra.mxu0 %v1009
      %1161 = vmatprep.subr.bf16.mxu0 0
      %1162 = vmatpush1.bf16.msra.mxu0 %v1012
      %1163 = vmatprep.subr.bf16.mxu0 0
      %1164 = vmatpush1.bf16.msra.mxu0 0
      %1165 = vmatprep.subr.bf16.mxu0 0
      %1166 = vmatpush1.bf16.msra.mxu0 0
      %1167 = vmatprep.subr.bf16.mxu0 0
      %1168 = vmatpush1.bf16.msra.mxu0 0
      %1169 = vmatprep.subr.bf16.mxu0 0
      %1170 = vmatpush1.bf16.msra.mxu0 0
      %1171 = vmatprep.subr.bf16.mxu0 0
      %1172 = vmatpush1.bf16.msra.mxu0 0
      %1173 = vmatprep.subr.bf16.mxu0 0
      %1174 = vmatpush1.bf16.msra.mxu0 0
      %1175 = vmatprep.subr.bf16.mxu0 0
      %1176 = vmatpush1.bf16.msra.mxu0 0
      %1177 = vmatprep.subr.bf16.mxu0 0
      %1178 = vmatpush1.bf16.msra.mxu0 0
      %1179 = vmatprep.subr.bf16.mxu0 0
      %1180 = vmatpush1.bf16.msra.mxu0 0
      %1181 = vmatprep.subr.bf16.mxu0 0
      %1182 = vmatpush1.bf16.msra.mxu0 0
      %1183 = vmatprep.subr.bf16.mxu0 0
      %1184 = vmatpush1.bf16.msra.mxu0 0
      %1185 = vmatprep.subr.bf16.mxu0 0
      %1186 = vmatpush1.bf16.msra.mxu0 0
      %1187 = vmatprep.subr.bf16.mxu0 0
      %1188 = vmatpush1.bf16.msra.mxu0 0
      %1189 = vmatprep.subr.bf16.mxu0 0
      %1190 = vmatpush1.bf16.msra.mxu0 0
      %1191 = vmatprep.mubr.bf16.mxu0 0
      %1192 = vmatmul.mubr.bf16.gmra.mrb[0].mxu0 %v1030
      %v1193 = vpop.f32.mrb[0].mxu0
      %v1194 = vadd.f32 %v1153, %v1193
      %v1195 = vpop.f32.mrb[0].mxu0
      %v1196 = vpop.f32.mrb[0].mxu0
      %v1197 = vadd.f32 %v1156, %v1196
      %v1198 = vpop.f32.mrb[0].mxu0
      %1199 = vdwg.mxu0
      %v1200 = vld [vmem:[%s4] sm:$0xff]
      %v1201 = vld [vmem:[%s4 + $0x8] sm:$0xff]
      %1203 = vset.pattern.permute.xlu0 0
      %1204 = vperm.xlu0 %1203, %v1200
      %v1205 = vpop.permute.xlu0 %1204
      %1208 = vset.pattern.permute.xlu0 0
      %1209 = vperm.xlu0 %1208, %v1201
      %v1210 = vpop.permute.xlu0 %1209
      %v1212 = vmul.f32 %v1110, %v1205
      %v1213 = vmul.f32 %v1112, %v1205
      %v1214 = vmul.f32 %v1194, %v1205
      %v1215 = vmul.f32 %v1114, %v1210
      %v1216 = vmul.f32 %v1116, %v1210
      %v1217 = vmul.f32 %v1197, %v1210
      %v1218 = vld [vmem:[%s5] sm:$0xff]
      %v1219 = vld [vmem:[%s5 + $0x8] sm:$0xff]
      %1221 = vset.pattern.permute.xlu0 0
      %1222 = vperm.xlu0 %1221, %v1218
      %v1223 = vpop.permute.xlu0 %1222
      %1226 = vset.pattern.permute.xlu0 0
      %1227 = vperm.xlu0 %1226, %v1219
      %v1228 = vpop.permute.xlu0 %1227
      %v1230 = vadd.f32 %v1212, %v1223
      %v1231 = vadd.f32 %v1213, %v1223
      %v1232 = vadd.f32 %v1214, %v1223
      %v1233 = vadd.f32 %v1215, %v1228
      %v1234 = vadd.f32 %v1216, %v1228
      %v1235 = vadd.f32 %v1217, %v1228
      %vm1236 = vcmp.ge.f32.partialorder %v1230, 0.0
      %vm1237 = vcmp.ge.f32.partialorder %v1231, 0.0
      %vm1238 = vcmp.ge.f32.partialorder %v1232, 0.0
      %vm1239 = vcmp.ge.f32.partialorder %v1233, 0.0
      %vm1240 = vcmp.ge.f32.partialorder %v1234, 0.0
      %vm1241 = vcmp.ge.f32.partialorder %v1235, 0.0
      %v1242 = vld [vmem:[%s6] sm:$0xff]
      %v1243 = vld [vmem:[%s6 + $0x8] sm:$0xff]
      %1245 = vset.pattern.permute.xlu0 0
      %1246 = vperm.xlu0 %1245, %v1242
      %v1247 = vpop.permute.xlu0 %1246
      %1250 = vset.pattern.permute.xlu0 0
      %1251 = vperm.xlu0 %1250, %v1243
      %v1252 = vpop.permute.xlu0 %1251
      %v1254 = vmul.f32 %v1247, %v1230
      %v1255 = vmul.f32 %v1247, %v1231
      %v1256 = vmul.f32 %v1247, %v1232
      %v1257 = vmul.f32 %v1252, %v1233
      %v1258 = vmul.f32 %v1252, %v1234
      %v1259 = vmul.f32 %v1252, %v1235
      %v1260 = vsel %vm1236, %v1230, %v1254
      %v1261 = vsel %vm1237, %v1231, %v1255
      %v1262 = vsel %vm1238, %v1232, %v1256
      %v1263 = vsel %vm1239, %v1233, %v1257
      %v1264 = vsel %vm1240, %v1234, %v1258
      %v1265 = vsel %vm1241, %v1235, %v1259
      %v1266 = vpack.c.bf16 %v1263, %v1260
      %v1267 = vpack.c.bf16 %v1264, %v1261
      %v1268 = vpack.c.bf16 %v1265, %v1262
      %v1269 = vld [vmem:[%s273] sm:$0xff]
      %v1270 = vld [vmem:[%s273 + $0x8] sm:$0xff]
      %v1271 = vld [vmem:[%s273 + $0x14] sm:$0xff]
      %v1272 = vld [vmem:[%s273 + $0x1c] sm:$0xff]
      %v1273 = vld [vmem:[%s273 + $0x28] sm:$0xff]
      %v1274 = vld [vmem:[%s273 + $0x30] sm:$0xff]
      %v1275 = vld [vmem:[%s273 + $0x3c] sm:$0xff]
      %v1276 = vld [vmem:[%s273 + $0x44] sm:$0xff]
      %v1285 = vunpack.c.l.b16 %v1269
      %v1286 = vunpack.c.h.b16 %v1269
      %v1287 = vunpack.c.l.b16 %v1270
      %v1288 = vunpack.c.h.b16 %v1270
      %v1289 = vunpack.c.l.b16 %v1271
      %v1290 = vunpack.c.h.b16 %v1271
      %v1291 = vunpack.c.l.b16 %v1272
      %v1292 = vunpack.c.h.b16 %v1272
      %v1293 = vunpack.c.l.b16 %v1273
      %v1294 = vunpack.c.h.b16 %v1273
      %v1295 = vunpack.c.l.b16 %v1274
      %v1296 = vunpack.c.h.b16 %v1274
      %v1297 = vunpack.c.l.b16 %v1275
      %v1298 = vunpack.c.h.b16 %v1275
      %v1299 = vunpack.c.l.b16 %v1276
      %v1300 = vunpack.c.h.b16 %v1276
      %v1301 = vpack.c.b16 %v1289, %v1285
      %v1302 = vpack.c.b16 %v1290, %v1286
      %v1303 = vpack.c.b16 %v1291, %v1287
      %v1304 = vpack.c.b16 %v1292, %v1288
      %v1305 = vpack.c.b16 %v1297, %v1293
      %v1306 = vpack.c.b16 %v1298, %v1294
      %v1307 = vpack.c.b16 %v1299, %v1295
      %v1308 = vpack.c.b16 %v1300, %v1296
      %1309 = vrot.lane.b32.xlu0 %v1301, 124
      %v1310 = vpop.permute.xlu0 %1309
      %1311 = vrot.lane.b32.xlu0 %v1302, 124
      %v1312 = vpop.permute.xlu0 %1311
      %1313 = vrot.lane.b32.xlu0 %v1303, 124
      %v1314 = vpop.permute.xlu0 %1313
      %1315 = vrot.lane.b32.xlu0 %v1304, 124
      %v1316 = vpop.permute.xlu0 %1315
      %1317 = vrot.lane.b32.xlu0 %v1305, 124
      %v1318 = vpop.permute.xlu0 %1317
      %1319 = vrot.lane.b32.xlu0 %v1306, 124
      %v1320 = vpop.permute.xlu0 %1319
      %1321 = vrot.lane.b32.xlu0 %v1307, 124
      %v1322 = vpop.permute.xlu0 %1321
      %1323 = vrot.lane.b32.xlu0 %v1308, 124
      %v1324 = vpop.permute.xlu0 %1323
      %vm1325 = vcmask 1014784
      %v1326 = vsel %vm1325, %v1310, %v1312
      %v1327 = vsel %vm1325, %v1312, %v1314
      %v1328 = vsel %vm1325, %v1314, %v1316
      %v1329 = vsel %vm1325, %v1318, %v1320
      %v1330 = vsel %vm1325, %v1320, %v1322
      %v1331 = vsel %vm1325, %v1322, %v1324
      %s1338 = scalar_lea.vmem [#allocation2], 432
      %1339 = vst [vmem:[%s1338] sm:$0xff] %v1326
      %1340 = vst [vmem:[%s1338 + $0x8] sm:$0xff] %v1327
      %1341 = vst [vmem:[%s1338 + $0x10] sm:$0xff] %v1328
      %1342 = vst [vmem:[%s1338 + $0x18] sm:$0xff] %v1329
      %1343 = vst [vmem:[%s1338 + $0x20] sm:$0xff] %v1330
      %1344 = vst [vmem:[%s1338 + $0x28] sm:$0xff] %v1331
      %v1345 = vld [vmem:[%s273] sm:$0xff]
      %v1346 = vld [vmem:[%s273 + $0x8] sm:$0xff]
      %v1347 = vld [vmem:[%s273 + $0x14] sm:$0xff]
      %v1348 = vld [vmem:[%s273 + $0x1c] sm:$0xff]
      %v1349 = vld [vmem:[%s273 + $0x28] sm:$0xff]
      %v1350 = vld [vmem:[%s273 + $0x30] sm:$0xff]
      %v1351 = vld [vmem:[%s273 + $0x3c] sm:$0xff]
      %v1352 = vld [vmem:[%s273 + $0x44] sm:$0xff]
      %v1361 = vunpack.c.l.b16 %v1345
      %v1362 = vunpack.c.h.b16 %v1345
      %v1363 = vunpack.c.l.b16 %v1346
      %v1364 = vunpack.c.h.b16 %v1346
      %v1365 = vunpack.c.l.b16 %v1347
      %v1366 = vunpack.c.h.b16 %v1347
      %v1367 = vunpack.c.l.b16 %v1348
      %v1368 = vunpack.c.h.b16 %v1348
      %v1369 = vunpack.c.l.b16 %v1349
      %v1370 = vunpack.c.h.b16 %v1349
      %v1371 = vunpack.c.l.b16 %v1350
      %v1372 = vunpack.c.h.b16 %v1350
      %v1373 = vunpack.c.l.b16 %v1351
      %v1374 = vunpack.c.h.b16 %v1351
      %v1375 = vunpack.c.l.b16 %v1352
      %v1376 = vunpack.c.h.b16 %v1352
      %v1377 = vpack.c.b16 %v1365, %v1361
      %v1378 = vpack.c.b16 %v1366, %v1362
      %v1379 = vpack.c.b16 %v1367, %v1363
      %v1380 = vpack.c.b16 %v1368, %v1364
      %v1381 = vpack.c.b16 %v1373, %v1369
      %v1382 = vpack.c.b16 %v1374, %v1370
      %v1383 = vpack.c.b16 %v1375, %v1371
      %v1384 = vpack.c.b16 %v1376, %v1372
      %1385 = vrot.lane.b32.xlu0 %v1377, 120
      %v1386 = vpop.permute.xlu0 %1385
      %1387 = vrot.lane.b32.xlu0 %v1378, 120
      %v1388 = vpop.permute.xlu0 %1387
      %1389 = vrot.lane.b32.xlu0 %v1379, 120
      %v1390 = vpop.permute.xlu0 %1389
      %1391 = vrot.lane.b32.xlu0 %v1380, 120
      %v1392 = vpop.permute.xlu0 %1391
      %1393 = vrot.lane.b32.xlu0 %v1381, 120
      %v1394 = vpop.permute.xlu0 %1393
      %1395 = vrot.lane.b32.xlu0 %v1382, 120
      %v1396 = vpop.permute.xlu0 %1395
      %1397 = vrot.lane.b32.xlu0 %v1383, 120
      %v1398 = vpop.permute.xlu0 %1397
      %1399 = vrot.lane.b32.xlu0 %v1384, 120
      %v1400 = vpop.permute.xlu0 %1399
      %vm1401 = vcmask 982016
      %v1402 = vsel %vm1401, %v1386, %v1388
      %v1403 = vsel %vm1401, %v1388, %v1390
      %v1404 = vsel %vm1401, %v1390, %v1392
      %v1405 = vsel %vm1401, %v1394, %v1396
      %v1406 = vsel %vm1401, %v1396, %v1398
      %v1407 = vsel %vm1401, %v1398, %v1400
      %1414 = vst [vmem:[%s1338 + $0x30] sm:$0xff] %v1402
      %1415 = vst [vmem:[%s1338 + $0x38] sm:$0xff] %v1403
      %1416 = vst [vmem:[%s1338 + $0x40] sm:$0xff] %v1404
      %1417 = vst [vmem:[%s1338 + $0x48] sm:$0xff] %v1405
      %1418 = vst [vmem:[%s1338 + $0x50] sm:$0xff] %v1406
      %1419 = vst [vmem:[%s1338 + $0x58] sm:$0xff] %v1407
      %v1420 = vld [vmem:[%s273] sm:$0xff]
      %v1421 = vld [vmem:[%s273 + $0x8] sm:$0xff]
      %v1422 = vld [vmem:[%s273 + $0x14] sm:$0xff]
      %v1423 = vld [vmem:[%s273 + $0x1c] sm:$0xff]
      %v1424 = vld [vmem:[%s273 + $0x28] sm:$0xff]
      %v1425 = vld [vmem:[%s273 + $0x30] sm:$0xff]
      %v1426 = vld [vmem:[%s273 + $0x3c] sm:$0xff]
      %v1427 = vld [vmem:[%s273 + $0x44] sm:$0xff]
      %v1436 = vunpack.c.l.b16 %v1420
      %v1437 = vunpack.c.h.b16 %v1420
      %v1438 = vunpack.c.l.b16 %v1421
      %v1439 = vunpack.c.h.b16 %v1421
      %v1440 = vunpack.c.l.b16 %v1422
      %v1441 = vunpack.c.h.b16 %v1422
      %v1442 = vunpack.c.l.b16 %v1423
      %v1443 = vunpack.c.h.b16 %v1423
      %v1444 = vunpack.c.l.b16 %v1424
      %v1445 = vunpack.c.h.b16 %v1424
      %v1446 = vunpack.c.l.b16 %v1425
      %v1447 = vunpack.c.h.b16 %v1425
      %v1448 = vunpack.c.l.b16 %v1426
      %v1449 = vunpack.c.h.b16 %v1426
      %v1450 = vunpack.c.l.b16 %v1427
      %v1451 = vunpack.c.h.b16 %v1427
      %v1452 = vpack.c.b16 %v1440, %v1436
      %v1453 = vpack.c.b16 %v1441, %v1437
      %v1454 = vpack.c.b16 %v1442, %v1438
      %v1455 = vpack.c.b16 %v1443, %v1439
      %v1456 = vpack.c.b16 %v1448, %v1444
      %v1457 = vpack.c.b16 %v1449, %v1445
      %v1458 = vpack.c.b16 %v1450, %v1446
      %v1459 = vpack.c.b16 %v1451, %v1447
      %1460 = vrot.lane.b32.xlu0 %v1452, 116
      %v1461 = vpop.permute.xlu0 %1460
      %1462 = vrot.lane.b32.xlu0 %v1453, 116
      %v1463 = vpop.permute.xlu0 %1462
      %1464 = vrot.lane.b32.xlu0 %v1454, 116
      %v1465 = vpop.permute.xlu0 %1464
      %1466 = vrot.lane.b32.xlu0 %v1455, 116
      %v1467 = vpop.permute.xlu0 %1466
      %1468 = vrot.lane.b32.xlu0 %v1456, 116
      %v1469 = vpop.permute.xlu0 %1468
      %1470 = vrot.lane.b32.xlu0 %v1457, 116
      %v1471 = vpop.permute.xlu0 %1470
      %1472 = vrot.lane.b32.xlu0 %v1458, 116
      %v1473 = vpop.permute.xlu0 %1472
      %1474 = vrot.lane.b32.xlu0 %v1459, 116
      %v1475 = vpop.permute.xlu0 %1474
      %vm1476 = vcmask 949248
      %v1477 = vsel %vm1476, %v1461, %v1463
      %v1478 = vsel %vm1476, %v1463, %v1465
      %v1479 = vsel %vm1476, %v1465, %v1467
      %v1480 = vsel %vm1476, %v1469, %v1471
      %v1481 = vsel %vm1476, %v1471, %v1473
      %v1482 = vsel %vm1476, %v1473, %v1475
      %1489 = vst [vmem:[%s1338 + $0x60] sm:$0xff] %v1477
      %1490 = vst [vmem:[%s1338 + $0x68] sm:$0xff] %v1478
      %1491 = vst [vmem:[%s1338 + $0x70] sm:$0xff] %v1479
      %1492 = vst [vmem:[%s1338 + $0x78] sm:$0xff] %v1480
      %1493 = vst [vmem:[%s1338 + $0x80] sm:$0xff] %v1481
      %1494 = vst [vmem:[%s1338 + $0x88] sm:$0xff] %v1482
      %v1495 = vld [vmem:[%s273] sm:$0xff]
      %v1496 = vld [vmem:[%s273 + $0x8] sm:$0xff]
      %v1497 = vld [vmem:[%s273 + $0x14] sm:$0xff]
      %v1498 = vld [vmem:[%s273 + $0x1c] sm:$0xff]
      %v1499 = vld [vmem:[%s273 + $0x28] sm:$0xff]
      %v1500 = vld [vmem:[%s273 + $0x30] sm:$0xff]
      %v1501 = vld [vmem:[%s273 + $0x3c] sm:$0xff]
      %v1502 = vld [vmem:[%s273 + $0x44] sm:$0xff]
      %v1511 = vunpack.c.l.b16 %v1495
      %v1512 = vunpack.c.h.b16 %v1495
      %v1513 = vunpack.c.l.b16 %v1496
      %v1514 = vunpack.c.h.b16 %v1496
      %v1515 = vunpack.c.l.b16 %v1497
      %v1516 = vunpack.c.h.b16 %v1497
      %v1517 = vunpack.c.l.b16 %v1498
      %v1518 = vunpack.c.h.b16 %v1498
      %v1519 = vunpack.c.l.b16 %v1499
      %v1520 = vunpack.c.h.b16 %v1499
      %v1521 = vunpack.c.l.b16 %v1500
      %v1522 = vunpack.c.h.b16 %v1500
      %v1523 = vunpack.c.l.b16 %v1501
      %v1524 = vunpack.c.h.b16 %v1501
      %v1525 = vunpack.c.l.b16 %v1502
      %v1526 = vunpack.c.h.b16 %v1502
      %v1527 = vpack.c.b16 %v1515, %v1511
      %v1528 = vpack.c.b16 %v1516, %v1512
      %v1529 = vpack.c.b16 %v1517, %v1513
      %v1530 = vpack.c.b16 %v1518, %v1514
      %v1531 = vpack.c.b16 %v1523, %v1519
      %v1532 = vpack.c.b16 %v1524, %v1520
      %v1533 = vpack.c.b16 %v1525, %v1521
      %v1534 = vpack.c.b16 %v1526, %v1522
      %1535 = vrot.lane.b32.xlu0 %v1527, 28
      %v1536 = vpop.permute.xlu0 %1535
      %1537 = vrot.lane.b32.xlu0 %v1528, 28
      %v1538 = vpop.permute.xlu0 %1537
      %1539 = vrot.lane.b32.xlu0 %v1529, 28
      %v1540 = vpop.permute.xlu0 %1539
      %1541 = vrot.lane.b32.xlu0 %v1530, 28
      %v1542 = vpop.permute.xlu0 %1541
      %1543 = vrot.lane.b32.xlu0 %v1531, 28
      %v1544 = vpop.permute.xlu0 %1543
      %1545 = vrot.lane.b32.xlu0 %v1532, 28
      %v1546 = vpop.permute.xlu0 %1545
      %1547 = vrot.lane.b32.xlu0 %v1533, 28
      %v1548 = vpop.permute.xlu0 %1547
      %1549 = vrot.lane.b32.xlu0 %v1534, 28
      %v1550 = vpop.permute.xlu0 %1549
      %vm1551 = vcmask 228352
      %v1552 = vsel %vm1551, %v1536, %v1538
      %v1553 = vsel %vm1551, %v1538, %v1540
      %v1554 = vsel %vm1551, %v1540, %v1542
      %v1555 = vsel %vm1551, %v1544, %v1546
      %v1556 = vsel %vm1551, %v1546, %v1548
      %v1557 = vsel %vm1551, %v1548, %v1550
      %1564 = vst [vmem:[%s1338 + $0x90] sm:$0xff] %v1552
      %1565 = vst [vmem:[%s1338 + $0x98] sm:$0xff] %v1553
      %1566 = vst [vmem:[%s1338 + $0xa0] sm:$0xff] %v1554
      %1567 = vst [vmem:[%s1338 + $0xa8] sm:$0xff] %v1555
      %1568 = vst [vmem:[%s1338 + $0xb0] sm:$0xff] %v1556
      %1569 = vst [vmem:[%s1338 + $0xb8] sm:$0xff] %v1557
      %v1570 = vld [vmem:[%s273] sm:$0xff]
      %v1571 = vld [vmem:[%s273 + $0x8] sm:$0xff]
      %v1572 = vld [vmem:[%s273 + $0x14] sm:$0xff]
      %v1573 = vld [vmem:[%s273 + $0x1c] sm:$0xff]
      %v1574 = vld [vmem:[%s273 + $0x28] sm:$0xff]
      %v1575 = vld [vmem:[%s273 + $0x30] sm:$0xff]
      %v1576 = vld [vmem:[%s273 + $0x3c] sm:$0xff]
      %v1577 = vld [vmem:[%s273 + $0x44] sm:$0xff]
      %v1586 = vunpack.c.l.b16 %v1570
      %v1587 = vunpack.c.h.b16 %v1570
      %v1588 = vunpack.c.l.b16 %v1571
      %v1589 = vunpack.c.h.b16 %v1571
      %v1590 = vunpack.c.l.b16 %v1572
      %v1591 = vunpack.c.h.b16 %v1572
      %v1592 = vunpack.c.l.b16 %v1573
      %v1593 = vunpack.c.h.b16 %v1573
      %v1594 = vunpack.c.l.b16 %v1574
      %v1595 = vunpack.c.h.b16 %v1574
      %v1596 = vunpack.c.l.b16 %v1575
      %v1597 = vunpack.c.h.b16 %v1575
      %v1598 = vunpack.c.l.b16 %v1576
      %v1599 = vunpack.c.h.b16 %v1576
      %v1600 = vunpack.c.l.b16 %v1577
      %v1601 = vunpack.c.h.b16 %v1577
      %v1602 = vpack.c.b16 %v1590, %v1586
      %v1603 = vpack.c.b16 %v1591, %v1587
      %v1604 = vpack.c.b16 %v1592, %v1588
      %v1605 = vpack.c.b16 %v1593, %v1589
      %v1606 = vpack.c.b16 %v1598, %v1594
      %v1607 = vpack.c.b16 %v1599, %v1595
      %v1608 = vpack.c.b16 %v1600, %v1596
      %v1609 = vpack.c.b16 %v1601, %v1597
      %1610 = vrot.lane.b32.xlu0 %v1602, 24
      %v1611 = vpop.permute.xlu0 %1610
      %1612 = vrot.lane.b32.xlu0 %v1603, 24
      %v1613 = vpop.permute.xlu0 %1612
      %1614 = vrot.lane.b32.xlu0 %v1604, 24
      %v1615 = vpop.permute.xlu0 %1614
      %1616 = vrot.lane.b32.xlu0 %v1605, 24
      %v1617 = vpop.permute.xlu0 %1616
      %1618 = vrot.lane.b32.xlu0 %v1606, 24
      %v1619 = vpop.permute.xlu0 %1618
      %1620 = vrot.lane.b32.xlu0 %v1607, 24
      %v1621 = vpop.permute.xlu0 %1620
      %1622 = vrot.lane.b32.xlu0 %v1608, 24
      %v1623 = vpop.permute.xlu0 %1622
      %1624 = vrot.lane.b32.xlu0 %v1609, 24
      %v1625 = vpop.permute.xlu0 %1624
      %v1626 = vsel %vm636, %v1611, %v1613
      %v1627 = vsel %vm636, %v1613, %v1615
      %v1628 = vsel %vm636, %v1615, %v1617
      %v1629 = vsel %vm636, %v1619, %v1621
      %v1630 = vsel %vm636, %v1621, %v1623
      %v1631 = vsel %vm636, %v1623, %v1625
      %1638 = vst [vmem:[%s1338 + $0xc0] sm:$0xff] %v1626
      %1639 = vst [vmem:[%s1338 + $0xc8] sm:$0xff] %v1627
      %1640 = vst [vmem:[%s1338 + $0xd0] sm:$0xff] %v1628
      %1641 = vst [vmem:[%s1338 + $0xd8] sm:$0xff] %v1629
      %1642 = vst [vmem:[%s1338 + $0xe0] sm:$0xff] %v1630
      %1643 = vst [vmem:[%s1338 + $0xe8] sm:$0xff] %v1631
      %v1644 = vld [vmem:[%s273] sm:$0xff]
      %v1645 = vld [vmem:[%s273 + $0x8] sm:$0xff]
      %v1646 = vld [vmem:[%s273 + $0x14] sm:$0xff]
      %v1647 = vld [vmem:[%s273 + $0x1c] sm:$0xff]
      %v1648 = vld [vmem:[%s273 + $0x28] sm:$0xff]
      %v1649 = vld [vmem:[%s273 + $0x30] sm:$0xff]
      %v1650 = vld [vmem:[%s273 + $0x3c] sm:$0xff]
      %v1651 = vld [vmem:[%s273 + $0x44] sm:$0xff]
      %v1660 = vunpack.c.l.b16 %v1644
      %v1661 = vunpack.c.h.b16 %v1644
      %v1662 = vunpack.c.l.b16 %v1645
      %v1663 = vunpack.c.h.b16 %v1645
      %v1664 = vunpack.c.l.b16 %v1646
      %v1665 = vunpack.c.h.b16 %v1646
      %v1666 = vunpack.c.l.b16 %v1647
      %v1667 = vunpack.c.h.b16 %v1647
      %v1668 = vunpack.c.l.b16 %v1648
      %v1669 = vunpack.c.h.b16 %v1648
      %v1670 = vunpack.c.l.b16 %v1649
      %v1671 = vunpack.c.h.b16 %v1649
      %v1672 = vunpack.c.l.b16 %v1650
      %v1673 = vunpack.c.h.b16 %v1650
      %v1674 = vunpack.c.l.b16 %v1651
      %v1675 = vunpack.c.h.b16 %v1651
      %v1676 = vpack.c.b16 %v1664, %v1660
      %v1677 = vpack.c.b16 %v1665, %v1661
      %v1678 = vpack.c.b16 %v1666, %v1662
      %v1679 = vpack.c.b16 %v1667, %v1663
      %v1680 = vpack.c.b16 %v1672, %v1668
      %v1681 = vpack.c.b16 %v1673, %v1669
      %v1682 = vpack.c.b16 %v1674, %v1670
      %v1683 = vpack.c.b16 %v1675, %v1671
      %1684 = vrot.lane.b32.xlu0 %v1676, 20
      %v1685 = vpop.permute.xlu0 %1684
      %1686 = vrot.lane.b32.xlu0 %v1677, 20
      %v1687 = vpop.permute.xlu0 %1686
      %1688 = vrot.lane.b32.xlu0 %v1678, 20
      %v1689 = vpop.permute.xlu0 %1688
      %1690 = vrot.lane.b32.xlu0 %v1679, 20
      %v1691 = vpop.permute.xlu0 %1690
      %1692 = vrot.lane.b32.xlu0 %v1680, 20
      %v1693 = vpop.permute.xlu0 %1692
      %1694 = vrot.lane.b32.xlu0 %v1681, 20
      %v1695 = vpop.permute.xlu0 %1694
      %1696 = vrot.lane.b32.xlu0 %v1682, 20
      %v1697 = vpop.permute.xlu0 %1696
      %1698 = vrot.lane.b32.xlu0 %v1683, 20
      %v1699 = vpop.permute.xlu0 %1698
      %vm1700 = vcmask 162816
      %v1701 = vsel %vm1700, %v1685, %v1687
      %v1702 = vsel %vm1700, %v1687, %v1689
      %v1703 = vsel %vm1700, %v1689, %v1691
      %v1704 = vsel %vm1700, %v1693, %v1695
      %v1705 = vsel %vm1700, %v1695, %v1697
      %v1706 = vsel %vm1700, %v1697, %v1699
      %1713 = vst [vmem:[%s1338 + $0xf0] sm:$0xff] %v1701
      %1714 = vst [vmem:[%s1338 + $0xf8] sm:$0xff] %v1702
      %1715 = vst [vmem:[%s1338 + $0x100] sm:$0xff] %v1703
      %1716 = vst [vmem:[%s1338 + $0x108] sm:$0xff] %v1704
      %1717 = vst [vmem:[%s1338 + $0x110] sm:$0xff] %v1705
      %1718 = vst [vmem:[%s1338 + $0x118] sm:$0xff] %v1706
      %v1719 = vld [vmem:[%s273 + $0x4] sm:$0xff]
      %v1720 = vld [vmem:[%s273 + $0xc] sm:$0xff]
      %v1721 = vld [vmem:[%s273 + $0x18] sm:$0xff]
      %v1722 = vld [vmem:[%s273 + $0x20] sm:$0xff]
      %v1723 = vld [vmem:[%s273 + $0x2c] sm:$0xff]
      %v1724 = vld [vmem:[%s273 + $0x34] sm:$0xff]
      %v1725 = vld [vmem:[%s273 + $0x40] sm:$0xff]
      %v1726 = vld [vmem:[%s273 + $0x48] sm:$0xff]
      %v1735 = vunpack.c.l.b16 %v1719
      %v1736 = vunpack.c.h.b16 %v1719
      %v1737 = vunpack.c.l.b16 %v1720
      %v1738 = vunpack.c.h.b16 %v1720
      %v1739 = vunpack.c.l.b16 %v1721
      %v1740 = vunpack.c.h.b16 %v1721
      %v1741 = vunpack.c.l.b16 %v1722
      %v1742 = vunpack.c.h.b16 %v1722
      %v1743 = vunpack.c.l.b16 %v1723
      %v1744 = vunpack.c.h.b16 %v1723
      %v1745 = vunpack.c.l.b16 %v1724
      %v1746 = vunpack.c.h.b16 %v1724
      %v1747 = vunpack.c.l.b16 %v1725
      %v1748 = vunpack.c.h.b16 %v1725
      %v1749 = vunpack.c.l.b16 %v1726
      %v1750 = vunpack.c.h.b16 %v1726
      %v1751 = vpack.c.b16 %v1739, %v1735
      %v1752 = vpack.c.b16 %v1740, %v1736
      %v1753 = vpack.c.b16 %v1741, %v1737
      %v1754 = vpack.c.b16 %v1742, %v1738
      %v1755 = vpack.c.b16 %v1747, %v1743
      %v1756 = vpack.c.b16 %v1748, %v1744
      %v1757 = vpack.c.b16 %v1749, %v1745
      %v1758 = vpack.c.b16 %v1750, %v1746
      %1759 = vrot.lane.b32.xlu0 %v1751, 60
      %v1760 = vpop.permute.xlu0 %1759
      %1761 = vrot.lane.b32.xlu0 %v1752, 60
      %v1762 = vpop.permute.xlu0 %1761
      %1763 = vrot.lane.b32.xlu0 %v1753, 60
      %v1764 = vpop.permute.xlu0 %1763
      %1765 = vrot.lane.b32.xlu0 %v1754, 60
      %v1766 = vpop.permute.xlu0 %1765
      %1767 = vrot.lane.b32.xlu0 %v1755, 60
      %v1768 = vpop.permute.xlu0 %1767
      %1769 = vrot.lane.b32.xlu0 %v1756, 60
      %v1770 = vpop.permute.xlu0 %1769
      %1771 = vrot.lane.b32.xlu0 %v1757, 60
      %v1772 = vpop.permute.xlu0 %1771
      %1773 = vrot.lane.b32.xlu0 %v1758, 60
      %v1774 = vpop.permute.xlu0 %1773
      %vm1775 = vcmask 490496
      %v1776 = vsel %vm1775, %v1760, %v1762
      %v1777 = vsel %vm1775, %v1762, %v1764
      %v1778 = vsel %vm1775, %v1764, %v1766
      %v1779 = vsel %vm1775, %v1768, %v1770
      %v1780 = vsel %vm1775, %v1770, %v1772
      %v1781 = vsel %vm1775, %v1772, %v1774
      %1788 = vst [vmem:[%s1338 + $0x120] sm:$0xff] %v1776
      %1789 = vst [vmem:[%s1338 + $0x128] sm:$0xff] %v1777
      %1790 = vst [vmem:[%s1338 + $0x130] sm:$0xff] %v1778
      %1791 = vst [vmem:[%s1338 + $0x138] sm:$0xff] %v1779
      %1792 = vst [vmem:[%s1338 + $0x140] sm:$0xff] %v1780
      %1793 = vst [vmem:[%s1338 + $0x148] sm:$0xff] %v1781
      %v1794 = vld [vmem:[%s273 + $0x4] sm:$0xff]
      %v1795 = vld [vmem:[%s273 + $0xc] sm:$0xff]
      %v1796 = vld [vmem:[%s273 + $0x18] sm:$0xff]
      %v1797 = vld [vmem:[%s273 + $0x20] sm:$0xff]
      %v1798 = vld [vmem:[%s273 + $0x2c] sm:$0xff]
      %v1799 = vld [vmem:[%s273 + $0x34] sm:$0xff]
      %v1800 = vld [vmem:[%s273 + $0x40] sm:$0xff]
      %v1801 = vld [vmem:[%s273 + $0x48] sm:$0xff]
      %v1810 = vunpack.c.l.b16 %v1794
      %v1811 = vunpack.c.h.b16 %v1794
      %v1812 = vunpack.c.l.b16 %v1795
      %v1813 = vunpack.c.h.b16 %v1795
      %v1814 = vunpack.c.l.b16 %v1796
      %v1815 = vunpack.c.h.b16 %v1796
      %v1816 = vunpack.c.l.b16 %v1797
      %v1817 = vunpack.c.h.b16 %v1797
      %v1818 = vunpack.c.l.b16 %v1798
      %v1819 = vunpack.c.h.b16 %v1798
      %v1820 = vunpack.c.l.b16 %v1799
      %v1821 = vunpack.c.h.b16 %v1799
      %v1822 = vunpack.c.l.b16 %v1800
      %v1823 = vunpack.c.h.b16 %v1800
      %v1824 = vunpack.c.l.b16 %v1801
      %v1825 = vunpack.c.h.b16 %v1801
      %v1826 = vpack.c.b16 %v1814, %v1810
      %v1827 = vpack.c.b16 %v1815, %v1811
      %v1828 = vpack.c.b16 %v1816, %v1812
      %v1829 = vpack.c.b16 %v1817, %v1813
      %v1830 = vpack.c.b16 %v1822, %v1818
      %v1831 = vpack.c.b16 %v1823, %v1819
      %v1832 = vpack.c.b16 %v1824, %v1820
      %v1833 = vpack.c.b16 %v1825, %v1821
      %1834 = vrot.lane.b32.xlu0 %v1826, 56
      %v1835 = vpop.permute.xlu0 %1834
      %1836 = vrot.lane.b32.xlu0 %v1827, 56
      %v1837 = vpop.permute.xlu0 %1836
      %1838 = vrot.lane.b32.xlu0 %v1828, 56
      %v1839 = vpop.permute.xlu0 %1838
      %1840 = vrot.lane.b32.xlu0 %v1829, 56
      %v1841 = vpop.permute.xlu0 %1840
      %1842 = vrot.lane.b32.xlu0 %v1830, 56
      %v1843 = vpop.permute.xlu0 %1842
      %1844 = vrot.lane.b32.xlu0 %v1831, 56
      %v1845 = vpop.permute.xlu0 %1844
      %1846 = vrot.lane.b32.xlu0 %v1832, 56
      %v1847 = vpop.permute.xlu0 %1846
      %1848 = vrot.lane.b32.xlu0 %v1833, 56
      %v1849 = vpop.permute.xlu0 %1848
      %vm1850 = vcmask 457728
      %v1851 = vsel %vm1850, %v1835, %v1837
      %v1852 = vsel %vm1850, %v1837, %v1839
      %v1853 = vsel %vm1850, %v1839, %v1841
      %v1854 = vsel %vm1850, %v1843, %v1845
      %v1855 = vsel %vm1850, %v1845, %v1847
      %v1856 = vsel %vm1850, %v1847, %v1849
      %1863 = vst [vmem:[%s1338 + $0x150] sm:$0xff] %v1851
      %1864 = vst [vmem:[%s1338 + $0x158] sm:$0xff] %v1852
      %1865 = vst [vmem:[%s1338 + $0x160] sm:$0xff] %v1853
      %1866 = vst [vmem:[%s1338 + $0x168] sm:$0xff] %v1854
      %1867 = vst [vmem:[%s1338 + $0x170] sm:$0xff] %v1855
      %1868 = vst [vmem:[%s1338 + $0x178] sm:$0xff] %v1856
      %v1869 = vld [vmem:[%s273 + $0x4] sm:$0xff]
      %v1870 = vld [vmem:[%s273 + $0xc] sm:$0xff]
      %v1871 = vld [vmem:[%s273 + $0x18] sm:$0xff]
      %v1872 = vld [vmem:[%s273 + $0x20] sm:$0xff]
      %v1873 = vld [vmem:[%s273 + $0x2c] sm:$0xff]
      %v1874 = vld [vmem:[%s273 + $0x34] sm:$0xff]
      %v1875 = vld [vmem:[%s273 + $0x40] sm:$0xff]
      %v1876 = vld [vmem:[%s273 + $0x48] sm:$0xff]
      %v1885 = vunpack.c.l.b16 %v1869
      %v1886 = vunpack.c.h.b16 %v1869
      %v1887 = vunpack.c.l.b16 %v1870
      %v1888 = vunpack.c.h.b16 %v1870
      %v1889 = vunpack.c.l.b16 %v1871
      %v1890 = vunpack.c.h.b16 %v1871
      %v1891 = vunpack.c.l.b16 %v1872
      %v1892 = vunpack.c.h.b16 %v1872
      %v1893 = vunpack.c.l.b16 %v1873
      %v1894 = vunpack.c.h.b16 %v1873
      %v1895 = vunpack.c.l.b16 %v1874
      %v1896 = vunpack.c.h.b16 %v1874
      %v1897 = vunpack.c.l.b16 %v1875
      %v1898 = vunpack.c.h.b16 %v1875
      %v1899 = vunpack.c.l.b16 %v1876
      %v1900 = vunpack.c.h.b16 %v1876
      %v1901 = vpack.c.b16 %v1889, %v1885
      %v1902 = vpack.c.b16 %v1890, %v1886
      %v1903 = vpack.c.b16 %v1891, %v1887
      %v1904 = vpack.c.b16 %v1892, %v1888
      %v1905 = vpack.c.b16 %v1897, %v1893
      %v1906 = vpack.c.b16 %v1898, %v1894
      %v1907 = vpack.c.b16 %v1899, %v1895
      %v1908 = vpack.c.b16 %v1900, %v1896
      %1909 = vrot.lane.b32.xlu0 %v1901, 52
      %v1910 = vpop.permute.xlu0 %1909
      %1911 = vrot.lane.b32.xlu0 %v1902, 52
      %v1912 = vpop.permute.xlu0 %1911
      %1913 = vrot.lane.b32.xlu0 %v1903, 52
      %v1914 = vpop.permute.xlu0 %1913
      %1915 = vrot.lane.b32.xlu0 %v1904, 52
      %v1916 = vpop.permute.xlu0 %1915
      %1917 = vrot.lane.b32.xlu0 %v1905, 52
      %v1918 = vpop.permute.xlu0 %1917
      %1919 = vrot.lane.b32.xlu0 %v1906, 52
      %v1920 = vpop.permute.xlu0 %1919
      %1921 = vrot.lane.b32.xlu0 %v1907, 52
      %v1922 = vpop.permute.xlu0 %1921
      %1923 = vrot.lane.b32.xlu0 %v1908, 52
      %v1924 = vpop.permute.xlu0 %1923
      %vm1925 = vcmask 424960
      %v1926 = vsel %vm1925, %v1910, %v1912
      %v1927 = vsel %vm1925, %v1912, %v1914
      %v1928 = vsel %vm1925, %v1914, %v1916
      %v1929 = vsel %vm1925, %v1918, %v1920
      %v1930 = vsel %vm1925, %v1920, %v1922
      %v1931 = vsel %vm1925, %v1922, %v1924
      %1938 = vst [vmem:[%s1338 + $0x180] sm:$0xff] %v1926
      %1939 = vst [vmem:[%s1338 + $0x188] sm:$0xff] %v1927
      %1940 = vst [vmem:[%s1338 + $0x190] sm:$0xff] %v1928
      %1941 = vst [vmem:[%s1338 + $0x198] sm:$0xff] %v1929
      %1942 = vst [vmem:[%s1338 + $0x1a0] sm:$0xff] %v1930
      %1943 = vst [vmem:[%s1338 + $0x1a8] sm:$0xff] %v1931
      %v1944 = vld [vmem:[%s2] sm:$0xff]
      %v1945 = vld [vmem:[%s2 + $0x8] sm:$0xf]
      %v1946 = vld [vmem:[%s2 + $0xc] sm:$0xff]
      %v1947 = vld [vmem:[%s2 + $0x14] sm:$0xf]
      %v1948 = vld [vmem:[%s1338] sm:$0xff]
      %v1949 = vld [vmem:[%s1338 + $0x8] sm:$0xff]
      %v1950 = vld [vmem:[%s1338 + $0x10] sm:$0xff]
      %v1951 = vld [vmem:[%s1338 + $0x18] sm:$0xff]
      %v1952 = vld [vmem:[%s1338 + $0x20] sm:$0xff]
      %v1953 = vld [vmem:[%s1338 + $0x28] sm:$0xff]
      %v1954 = vld [vmem:[%s1338 + $0x30] sm:$0xff]
      %v1955 = vld [vmem:[%s1338 + $0x38] sm:$0xff]
      %v1956 = vld [vmem:[%s1338 + $0x40] sm:$0xff]
      %v1957 = vld [vmem:[%s1338 + $0x48] sm:$0xff]
      %v1958 = vld [vmem:[%s1338 + $0x50] sm:$0xff]
      %v1959 = vld [vmem:[%s1338 + $0x58] sm:$0xff]
      %v1960 = vld [vmem:[%s1338 + $0x60] sm:$0xff]
      %v1961 = vld [vmem:[%s1338 + $0x68] sm:$0xff]
      %v1962 = vld [vmem:[%s1338 + $0x70] sm:$0xff]
      %v1963 = vld [vmem:[%s1338 + $0x78] sm:$0xff]
      %v1964 = vld [vmem:[%s1338 + $0x80] sm:$0xff]
      %v1965 = vld [vmem:[%s1338 + $0x88] sm:$0xff]
      %v1966 = vld [vmem:[%s1338 + $0x90] sm:$0xff]
      %v1967 = vld [vmem:[%s1338 + $0x98] sm:$0xff]
      %v1968 = vld [vmem:[%s1338 + $0xa0] sm:$0xff]
      %v1969 = vld [vmem:[%s1338 + $0xa8] sm:$0xff]
      %v1970 = vld [vmem:[%s1338 + $0xb0] sm:$0xff]
      %v1971 = vld [vmem:[%s1338 + $0xb8] sm:$0xff]
      %v1972 = vld [vmem:[%s1338 + $0xc0] sm:$0xff]
      %v1973 = vld [vmem:[%s1338 + $0xc8] sm:$0xff]
      %v1974 = vld [vmem:[%s1338 + $0xd0] sm:$0xff]
      %v1975 = vld [vmem:[%s1338 + $0xd8] sm:$0xff]
      %v1976 = vld [vmem:[%s1338 + $0xe0] sm:$0xff]
      %v1977 = vld [vmem:[%s1338 + $0xe8] sm:$0xff]
      %v1978 = vld [vmem:[%s1338 + $0xf0] sm:$0xff]
      %v1979 = vld [vmem:[%s1338 + $0xf8] sm:$0xff]
      %v1980 = vld [vmem:[%s1338 + $0x100] sm:$0xff]
      %v1981 = vld [vmem:[%s1338 + $0x108] sm:$0xff]
      %v1982 = vld [vmem:[%s1338 + $0x110] sm:$0xff]
      %v1983 = vld [vmem:[%s1338 + $0x118] sm:$0xff]
      %v1984 = vld [vmem:[%s1338 + $0x120] sm:$0xff]
      %v1985 = vld [vmem:[%s1338 + $0x128] sm:$0xff]
      %v1986 = vld [vmem:[%s1338 + $0x130] sm:$0xff]
      %v1987 = vld [vmem:[%s1338 + $0x138] sm:$0xff]
      %v1988 = vld [vmem:[%s1338 + $0x140] sm:$0xff]
      %v1989 = vld [vmem:[%s1338 + $0x148] sm:$0xff]
      %v1990 = vld [vmem:[%s1338 + $0x150] sm:$0xff]
      %v1991 = vld [vmem:[%s1338 + $0x158] sm:$0xff]
      %v1992 = vld [vmem:[%s1338 + $0x160] sm:$0xff]
      %v1993 = vld [vmem:[%s1338 + $0x168] sm:$0xff]
      %v1994 = vld [vmem:[%s1338 + $0x170] sm:$0xff]
      %v1995 = vld [vmem:[%s1338 + $0x178] sm:$0xff]
      %v1996 = vld [vmem:[%s1338 + $0x180] sm:$0xff]
      %v1997 = vld [vmem:[%s1338 + $0x188] sm:$0xff]
      %v1998 = vld [vmem:[%s1338 + $0x190] sm:$0xff]
      %v1999 = vld [vmem:[%s1338 + $0x198] sm:$0xff]
      %v2000 = vld [vmem:[%s1338 + $0x1a0] sm:$0xff]
      %v2001 = vld [vmem:[%s1338 + $0x1a8] sm:$0xff]
      %v2006 = vunpack.c.l.b16 %v1944
      %v2007 = vunpack.c.h.b16 %v1944
      %v2008 = vunpack.c.l.b16 %v1945
      %v2009 = vunpack.c.l.b16 %v1946
      %v2010 = vunpack.c.h.b16 %v1946
      %v2011 = vunpack.c.l.b16 %v1947
      %v2012 = vpack.c.b16 %v2009, %v2006
      %v2013 = vpack.c.b16 %v2010, %v2007
      %v2014 = vpack.c.b16 %v2011, %v2008
      %v2018 = vsel %vm1028, %v2014, 0
      %2020 = vmatprep.subr.bf16.mxu0 %v1949
      %2021 = vmatpush1.bf16.msra.mxu0 %v1948
      %2022 = vmatprep.subr.bf16.mxu0 %v1952
      %2023 = vmatpush1.bf16.msra.mxu0 %v1951
      %2024 = vmatprep.subr.bf16.mxu0 %v1955
      %2025 = vmatpush1.bf16.msra.mxu0 %v1954
      %2026 = vmatprep.subr.bf16.mxu0 %v1958
      %2027 = vmatpush1.bf16.msra.mxu0 %v1957
      %2028 = vmatprep.subr.bf16.mxu0 %v1961
      %2029 = vmatpush1.bf16.msra.mxu0 %v1960
      %2030 = vmatprep.subr.bf16.mxu0 %v1964
      %2031 = vmatpush1.bf16.msra.mxu0 %v1963
      %2032 = vmatprep.subr.bf16.mxu0 %v1967
      %2033 = vmatpush1.bf16.msra.mxu0 %v1966
      %2034 = vmatprep.subr.bf16.mxu0 %v1970
      %2035 = vmatpush1.bf16.msra.mxu0 %v1969
      %2036 = vmatprep.subr.bf16.mxu0 %v1973
      %2037 = vmatpush1.bf16.msra.mxu0 %v1972
      %2038 = vmatprep.subr.bf16.mxu0 %v1976
      %2039 = vmatpush1.bf16.msra.mxu0 %v1975
      %2040 = vmatprep.subr.bf16.mxu0 %v1979
      %2041 = vmatpush1.bf16.msra.mxu0 %v1978
      %2042 = vmatprep.subr.bf16.mxu0 %v1982
      %2043 = vmatpush1.bf16.msra.mxu0 %v1981
      %2044 = vmatprep.subr.bf16.mxu0 %v1985
      %2045 = vmatpush1.bf16.msra.mxu0 %v1984
      %2046 = vmatprep.subr.bf16.mxu0 %v1988
      %2047 = vmatpush1.bf16.msra.mxu0 %v1987
      %2048 = vmatprep.subr.bf16.mxu0 %v1991
      %2049 = vmatpush1.bf16.msra.mxu0 %v1990
      %2050 = vmatprep.subr.bf16.mxu0 %v1994
      %2051 = vmatpush1.bf16.msra.mxu0 %v1993
      %2052 = vmatprep.mubr.bf16.mxu0 %v2013
      %2053 = vmatmul.mubr.bf16.gmra.mrb[0].mxu0 %v2012
      %v2054 = vpop.f32.mrb[0].mxu0
      %v2055 = vadd.f32 0.0, %v2054
      %v2056 = vpop.f32.mrb[0].mxu0
      %v2057 = vadd.f32 0.0, %v2056
      %v2058 = vpop.f32.mrb[0].mxu0
      %v2059 = vadd.f32 0.0, %v2058
      %v2060 = vpop.f32.mrb[0].mxu0
      %v2061 = vadd.f32 0.0, %v2060
      %2062 = vdwg.mxu0
      %2063 = vmatprep.subr.bf16.mxu0 %v1997
      %2064 = vmatpush1.bf16.msra.mxu0 %v1996
      %2065 = vmatprep.subr.bf16.mxu0 %v2000
      %2066 = vmatpush1.bf16.msra.mxu0 %v1999
      %2067 = vmatprep.subr.bf16.mxu0 0
      %2068 = vmatpush1.bf16.msra.mxu0 0
      %2069 = vmatprep.subr.bf16.mxu0 0
      %2070 = vmatpush1.bf16.msra.mxu0 0
      %2071 = vmatprep.subr.bf16.mxu0 0
      %2072 = vmatpush1.bf16.msra.mxu0 0
      %2073 = vmatprep.subr.bf16.mxu0 0
      %2074 = vmatpush1.bf16.msra.mxu0 0
      %2075 = vmatprep.subr.bf16.mxu0 0
      %2076 = vmatpush1.bf16.msra.mxu0 0
      %2077 = vmatprep.subr.bf16.mxu0 0
      %2078 = vmatpush1.bf16.msra.mxu0 0
      %2079 = vmatprep.subr.bf16.mxu0 0
      %2080 = vmatpush1.bf16.msra.mxu0 0
      %2081 = vmatprep.subr.bf16.mxu0 0
      %2082 = vmatpush1.bf16.msra.mxu0 0
      %2083 = vmatprep.subr.bf16.mxu0 0
      %2084 = vmatpush1.bf16.msra.mxu0 0
      %2085 = vmatprep.subr.bf16.mxu0 0
      %2086 = vmatpush1.bf16.msra.mxu0 0
      %2087 = vmatprep.subr.bf16.mxu0 0
      %2088 = vmatpush1.bf16.msra.mxu0 0
      %2089 = vmatprep.subr.bf16.mxu0 0
      %2090 = vmatpush1.bf16.msra.mxu0 0
      %2091 = vmatprep.subr.bf16.mxu0 0
      %2092 = vmatpush1.bf16.msra.mxu0 0
      %2093 = vmatprep.subr.bf16.mxu0 0
      %2094 = vmatpush1.bf16.msra.mxu0 0
      %2095 = vmatprep.mubr.bf16.mxu0 0
      %2096 = vmatmul.mubr.bf16.gmra.mrb[0].mxu0 %v2018
      %v2097 = vpop.f32.mrb[0].mxu0
      %v2098 = vadd.f32 %v2055, %v2097
      %v2099 = vpop.f32.mrb[0].mxu0
      %v2100 = vadd.f32 %v2057, %v2099
      %v2101 = vpop.f32.mrb[0].mxu0
      %v2102 = vadd.f32 %v2059, %v2101
      %v2103 = vpop.f32.mrb[0].mxu0
      %v2104 = vadd.f32 %v2061, %v2103
      %2105 = vdwg.mxu0
      %2106 = vmatprep.subr.bf16.mxu0 0
      %2107 = vmatpush1.bf16.msra.mxu0 %v1950
      %2108 = vmatprep.subr.bf16.mxu0 0
      %2109 = vmatpush1.bf16.msra.mxu0 %v1953
      %2110 = vmatprep.subr.bf16.mxu0 0
      %2111 = vmatpush1.bf16.msra.mxu0 %v1956
      %2112 = vmatprep.subr.bf16.mxu0 0
      %2113 = vmatpush1.bf16.msra.mxu0 %v1959
      %2114 = vmatprep.subr.bf16.mxu0 0
      %2115 = vmatpush1.bf16.msra.mxu0 %v1962
      %2116 = vmatprep.subr.bf16.mxu0 0
      %2117 = vmatpush1.bf16.msra.mxu0 %v1965
      %2118 = vmatprep.subr.bf16.mxu0 0
      %2119 = vmatpush1.bf16.msra.mxu0 %v1968
      %2120 = vmatprep.subr.bf16.mxu0 0
      %2121 = vmatpush1.bf16.msra.mxu0 %v1971
      %2122 = vmatprep.subr.bf16.mxu0 0
      %2123 = vmatpush1.bf16.msra.mxu0 %v1974
      %2124 = vmatprep.subr.bf16.mxu0 0
      %2125 = vmatpush1.bf16.msra.mxu0 %v1977
      %2126 = vmatprep.subr.bf16.mxu0 0
      %2127 = vmatpush1.bf16.msra.mxu0 %v1980
      %2128 = vmatprep.subr.bf16.mxu0 0
      %2129 = vmatpush1.bf16.msra.mxu0 %v1983
      %2130 = vmatprep.subr.bf16.mxu0 0
      %2131 = vmatpush1.bf16.msra.mxu0 %v1986
      %2132 = vmatprep.subr.bf16.mxu0 0
      %2133 = vmatpush1.bf16.msra.mxu0 %v1989
      %2134 = vmatprep.subr.bf16.mxu0 0
      %2135 = vmatpush1.bf16.msra.mxu0 %v1992
      %2136 = vmatprep.subr.bf16.mxu0 0
      %2137 = vmatpush1.bf16.msra.mxu0 %v1995
      %2138 = vmatprep.mubr.bf16.mxu0 %v2013
      %2139 = vmatmul.mubr.bf16.gmra.mrb[0].mxu0 %v2012
      %v2140 = vpop.f32.mrb[0].mxu0
      %v2141 = vadd.f32 0.0, %v2140
      %v2142 = vpop.f32.mrb[0].mxu0
      %v2143 = vpop.f32.mrb[0].mxu0
      %v2144 = vadd.f32 0.0, %v2143
      %v2145 = vpop.f32.mrb[0].mxu0
      %2146 = vdwg.mxu0
      %2147 = vmatprep.subr.bf16.mxu0 0
      %2148 = vmatpush1.bf16.msra.mxu0 %v1998
      %2149 = vmatprep.subr.bf16.mxu0 0
      %2150 = vmatpush1.bf16.msra.mxu0 %v2001
      %2151 = vmatprep.subr.bf16.mxu0 0
      %2152 = vmatpush1.bf16.msra.mxu0 0
      %2153 = vmatprep.subr.bf16.mxu0 0
      %2154 = vmatpush1.bf16.msra.mxu0 0
      %2155 = vmatprep.subr.bf16.mxu0 0
      %2156 = vmatpush1.bf16.msra.mxu0 0
      %2157 = vmatprep.subr.bf16.mxu0 0
      %2158 = vmatpush1.bf16.msra.mxu0 0
      %2159 = vmatprep.subr.bf16.mxu0 0
      %2160 = vmatpush1.bf16.msra.mxu0 0
      %2161 = vmatprep.subr.bf16.mxu0 0
      %2162 = vmatpush1.bf16.msra.mxu0 0
      %2163 = vmatprep.subr.bf16.mxu0 0
      %2164 = vmatpush1.bf16.msra.mxu0 0
      %2165 = vmatprep.subr.bf16.mxu0 0
      %2166 = vmatpush1.bf16.msra.mxu0 0
      %2167 = vmatprep.subr.bf16.mxu0 0
      %2168 = vmatpush1.bf16.msra.mxu0 0
      %2169 = vmatprep.subr.bf16.mxu0 0
      %2170 = vmatpush1.bf16.msra.mxu0 0
      %2171 = vmatprep.subr.bf16.mxu0 0
      %2172 = vmatpush1.bf16.msra.mxu0 0
      %2173 = vmatprep.subr.bf16.mxu0 0
      %2174 = vmatpush1.bf16.msra.mxu0 0
      %2175 = vmatprep.subr.bf16.mxu0 0
      %2176 = vmatpush1.bf16.msra.mxu0 0
      %2177 = vmatprep.subr.bf16.mxu0 0
      %2178 = vmatpush1.bf16.msra.mxu0 0
      %2179 = vmatprep.mubr.bf16.mxu0 0
      %2180 = vmatmul.mubr.bf16.gmra.mrb[0].mxu0 %v2018
      %v2181 = vpop.f32.mrb[0].mxu0
      %v2182 = vadd.f32 %v2141, %v2181
      %v2183 = vpop.f32.mrb[0].mxu0
      %v2184 = vpop.f32.mrb[0].mxu0
      %v2185 = vadd.f32 %v2144, %v2184
      %v2186 = vpop.f32.mrb[0].mxu0
      %2187 = vdwg.mxu0
      %v2188 = vld [vmem:[%s4 + $0x10] sm:$0xff]
      %v2189 = vld [vmem:[%s4 + $0x18] sm:$0xff]
      %2191 = vset.pattern.permute.xlu0 0
      %2192 = vperm.xlu0 %2191, %v2188
      %v2193 = vpop.permute.xlu0 %2192
      %2196 = vset.pattern.permute.xlu0 0
      %2197 = vperm.xlu0 %2196, %v2189
      %v2198 = vpop.permute.xlu0 %2197
      %v2200 = vmul.f32 %v2098, %v2193
      %v2201 = vmul.f32 %v2100, %v2193
      %v2202 = vmul.f32 %v2182, %v2193
      %v2203 = vmul.f32 %v2102, %v2198
      %v2204 = vmul.f32 %v2104, %v2198
      %v2205 = vmul.f32 %v2185, %v2198
      %v2206 = vld [vmem:[%s5 + $0x10] sm:$0xff]
      %v2207 = vld [vmem:[%s5 + $0x18] sm:$0xff]
      %2209 = vset.pattern.permute.xlu0 0
      %2210 = vperm.xlu0 %2209, %v2206
      %v2211 = vpop.permute.xlu0 %2210
      %2214 = vset.pattern.permute.xlu0 0
      %2215 = vperm.xlu0 %2214, %v2207
      %v2216 = vpop.permute.xlu0 %2215
      %v2218 = vadd.f32 %v2200, %v2211
      %v2219 = vadd.f32 %v2201, %v2211
      %v2220 = vadd.f32 %v2202, %v2211
      %v2221 = vadd.f32 %v2203, %v2216
      %v2222 = vadd.f32 %v2204, %v2216
      %v2223 = vadd.f32 %v2205, %v2216
      %vm2224 = vcmp.ge.f32.partialorder %v2218, 0.0
      %vm2225 = vcmp.ge.f32.partialorder %v2219, 0.0
      %vm2226 = vcmp.ge.f32.partialorder %v2220, 0.0
      %vm2227 = vcmp.ge.f32.partialorder %v2221, 0.0
      %vm2228 = vcmp.ge.f32.partialorder %v2222, 0.0
      %vm2229 = vcmp.ge.f32.partialorder %v2223, 0.0
      %v2230 = vld [vmem:[%s6 + $0x10] sm:$0xff]
      %v2231 = vld [vmem:[%s6 + $0x18] sm:$0xff]
      %2233 = vset.pattern.permute.xlu0 0
      %2234 = vperm.xlu0 %2233, %v2230
      %v2235 = vpop.permute.xlu0 %2234
      %2238 = vset.pattern.permute.xlu0 0
      %2239 = vperm.xlu0 %2238, %v2231
      %v2240 = vpop.permute.xlu0 %2239
      %v2242 = vmul.f32 %v2235, %v2218
      %v2243 = vmul.f32 %v2235, %v2219
      %v2244 = vmul.f32 %v2235, %v2220
      %v2245 = vmul.f32 %v2240, %v2221
      %v2246 = vmul.f32 %v2240, %v2222
      %v2247 = vmul.f32 %v2240, %v2223
      %v2248 = vsel %vm2224, %v2218, %v2242
      %v2249 = vsel %vm2225, %v2219, %v2243
      %v2250 = vsel %vm2226, %v2220, %v2244
      %v2251 = vsel %vm2227, %v2221, %v2245
      %v2252 = vsel %vm2228, %v2222, %v2246
      %v2253 = vsel %vm2229, %v2223, %v2247
      %v2254 = vpack.c.bf16 %v2251, %v2248
      %v2255 = vpack.c.bf16 %v2252, %v2249
      %v2256 = vpack.c.bf16 %v2253, %v2250
      %v2257 = vld [vmem:[%s3] sm:$0xf]
      %v2258 = vld [vmem:[%s3 + $0x4] sm:$0xf]
      %v2259 = vld [vmem:[%s3 + $0x8] sm:$0xf]
      %v2260 = vld [vmem:[%s3 + $0xc] sm:$0xf]
      %v2265 = vunpack.c.l.b16 %v2257
      %v2266 = vunpack.c.l.b16 %v2258
      %v2267 = vunpack.c.l.b16 %v2259
      %v2268 = vunpack.c.l.b16 %v2260
      %v2269 = vpack.c.b16 %v2266, %v2265
      %v2270 = vpack.c.b16 %v2268, %v2267
      %v2272 = vsel %vm1028, %v2269, 0
      %v2275 = vsel %vm1028, %v2270, 0
      %2277 = vmatprep.subr.bf16.mxu0 %v1267
      %2278 = vmatpush1.bf16.msra.mxu0 %v1266
      %2279 = vmatprep.subr.bf16.mxu0 %v2255
      %2280 = vmatpush1.bf16.msra.mxu0 %v2254
      %2281 = vmatprep.subr.bf16.mxu0 0
      %2282 = vmatpush1.bf16.msra.mxu0 0
      %2283 = vmatprep.subr.bf16.mxu0 0
      %2284 = vmatpush1.bf16.msra.mxu0 0
      %2285 = vmatprep.subr.bf16.mxu0 0
      %2286 = vmatpush1.bf16.msra.mxu0 0
      %2287 = vmatprep.subr.bf16.mxu0 0
      %2288 = vmatpush1.bf16.msra.mxu0 0
      %2289 = vmatprep.subr.bf16.mxu0 0
      %2290 = vmatpush1.bf16.msra.mxu0 0
      %2291 = vmatprep.subr.bf16.mxu0 0
      %2292 = vmatpush1.bf16.msra.mxu0 0
      %2293 = vmatprep.subr.bf16.mxu0 0
      %2294 = vmatpush1.bf16.msra.mxu0 0
      %2295 = vmatprep.subr.bf16.mxu0 0
      %2296 = vmatpush1.bf16.msra.mxu0 0
      %2297 = vmatprep.subr.bf16.mxu0 0
      %2298 = vmatpush1.bf16.msra.mxu0 0
      %2299 = vmatprep.subr.bf16.mxu0 0
      %2300 = vmatpush1.bf16.msra.mxu0 0
      %2301 = vmatprep.subr.bf16.mxu0 0
      %2302 = vmatpush1.bf16.msra.mxu0 0
      %2303 = vmatprep.subr.bf16.mxu0 0
      %2304 = vmatpush1.bf16.msra.mxu0 0
      %2305 = vmatprep.subr.bf16.mxu0 0
      %2306 = vmatpush1.bf16.msra.mxu0 0
      %2307 = vmatprep.subr.bf16.mxu0 0
      %2308 = vmatpush1.bf16.msra.mxu0 0
      %2309 = vmatprep.mubr.bf16.mxu0 0
      %2310 = vmatmul.mubr.bf16.gmra.mrb[0].mxu0 %v2272
      %v2311 = vpop.f32.mrb[0].mxu0
      %v2312 = vadd.f32 0.0, %v2311
      %v2313 = vpop.f32.mrb[0].mxu0
      %v2314 = vadd.f32 0.0, %v2313
      %v2315 = vpop.f32.mrb[0].mxu0
      %v2316 = vadd.f32 0.0, %v2315
      %v2317 = vpop.f32.mrb[0].mxu0
      %v2318 = vadd.f32 0.0, %v2317
      %2319 = vmatprep.mubr.bf16.mxu0 0
      %2320 = vmatmul.mubr.bf16.gmra.mrb[0].mxu0 %v2275
      %v2321 = vpop.f32.mrb[0].mxu0
      %v2322 = vadd.f32 0.0, %v2321
      %v2323 = vpop.f32.mrb[0].mxu0
      %v2324 = vadd.f32 0.0, %v2323
      %v2325 = vpop.f32.mrb[0].mxu0
      %v2326 = vadd.f32 0.0, %v2325
      %v2327 = vpop.f32.mrb[0].mxu0
      %v2328 = vadd.f32 0.0, %v2327
      %2329 = vdwg.mxu0
      %2330 = vmatprep.subr.bf16.mxu0 0
      %2331 = vmatpush1.bf16.msra.mxu0 %v1268
      %2332 = vmatprep.subr.bf16.mxu0 0
      %2333 = vmatpush1.bf16.msra.mxu0 %v2256
      %2334 = vmatprep.subr.bf16.mxu0 0
      %2335 = vmatpush1.bf16.msra.mxu0 0
      %2336 = vmatprep.subr.bf16.mxu0 0
      %2337 = vmatpush1.bf16.msra.mxu0 0
      %2338 = vmatprep.subr.bf16.mxu0 0
      %2339 = vmatpush1.bf16.msra.mxu0 0
      %2340 = vmatprep.subr.bf16.mxu0 0
      %2341 = vmatpush1.bf16.msra.mxu0 0
      %2342 = vmatprep.subr.bf16.mxu0 0
      %2343 = vmatpush1.bf16.msra.mxu0 0
      %2344 = vmatprep.subr.bf16.mxu0 0
      %2345 = vmatpush1.bf16.msra.mxu0 0
      %2346 = vmatprep.subr.bf16.mxu0 0
      %2347 = vmatpush1.bf16.msra.mxu0 0
      %2348 = vmatprep.subr.bf16.mxu0 0
      %2349 = vmatpush1.bf16.msra.mxu0 0
      %2350 = vmatprep.subr.bf16.mxu0 0
      %2351 = vmatpush1.bf16.msra.mxu0 0
      %2352 = vmatprep.subr.bf16.mxu0 0
      %2353 = vmatpush1.bf16.msra.mxu0 0
      %2354 = vmatprep.subr.bf16.mxu0 0
      %2355 = vmatpush1.bf16.msra.mxu0 0
      %2356 = vmatprep.subr.bf16.mxu0 0
      %2357 = vmatpush1.bf16.msra.mxu0 0
      %2358 = vmatprep.subr.bf16.mxu0 0
      %2359 = vmatpush1.bf16.msra.mxu0 0
      %2360 = vmatprep.subr.bf16.mxu0 0
      %2361 = vmatpush1.bf16.msra.mxu0 0
      %2362 = vmatprep.mubr.bf16.mxu0 0
      %2363 = vmatmul.mubr.bf16.gmra.mrb[0].mxu0 %v2272
      %v2364 = vpop.f32.mrb[0].mxu0
      %v2365 = vadd.f32 0.0, %v2364
      %v2366 = vpop.f32.mrb[0].mxu0
      %v2367 = vpop.f32.mrb[0].mxu0
      %v2368 = vadd.f32 0.0, %v2367
      %v2369 = vpop.f32.mrb[0].mxu0
      %2370 = vmatprep.mubr.bf16.mxu0 0
      %2371 = vmatmul.mubr.bf16.gmra.mrb[0].mxu0 %v2275
      %v2372 = vpop.f32.mrb[0].mxu0
      %v2373 = vadd.f32 0.0, %v2372
      %v2374 = vpop.f32.mrb[0].mxu0
      %v2375 = vpop.f32.mrb[0].mxu0
      %v2376 = vadd.f32 0.0, %v2375
      %v2377 = vpop.f32.mrb[0].mxu0
      %2378 = vdwg.mxu0
      %v2379 = vxor.u32 %v2312, 2147483648
      %v2380 = vxor.u32 %v2314, 2147483648
      %v2381 = vxor.u32 %v2365, 2147483648
      %v2382 = vxor.u32 %v2316, 2147483648
      %v2383 = vxor.u32 %v2318, 2147483648
      %v2384 = vxor.u32 %v2368, 2147483648
      %v2385 = vxor.u32 %v2322, 2147483648
      %v2386 = vxor.u32 %v2324, 2147483648
      %v2387 = vxor.u32 %v2373, 2147483648
      %v2388 = vxor.u32 %v2326, 2147483648
      %v2389 = vxor.u32 %v2328, 2147483648
      %v2390 = vxor.u32 %v2376, 2147483648
      %v2391 = vmul.f32 %v2379, 1.442695
      %v2392 = vpow.pop %v2391
      %v2393 = vmul.f32 %v2380, 1.442695
      %v2394 = vpow.pop %v2393
      %v2395 = vmul.f32 %v2381, 1.442695
      %v2396 = vpow.pop %v2395
      %v2397 = vmul.f32 %v2382, 1.442695
      %v2398 = vpow.pop %v2397
      %v2399 = vmul.f32 %v2383, 1.442695
      %v2400 = vpow.pop %v2399
      %v2401 = vmul.f32 %v2384, 1.442695
      %v2402 = vpow.pop %v2401
      %v2403 = vmul.f32 %v2385, 1.442695
      %v2404 = vpow.pop %v2403
      %v2405 = vmul.f32 %v2386, 1.442695
      %v2406 = vpow.pop %v2405
      %v2407 = vmul.f32 %v2387, 1.442695
      %v2408 = vpow.pop %v2407
      %v2409 = vmul.f32 %v2388, 1.442695
      %v2410 = vpow.pop %v2409
      %v2411 = vmul.f32 %v2389, 1.442695
      %v2412 = vpow.pop %v2411
      %v2413 = vmul.f32 %v2390, 1.442695
      %v2414 = vpow.pop %v2413
      %v2415 = vadd.f32 %v2392, 1.0
      %v2416 = vadd.f32 %v2394, 1.0
      %v2417 = vadd.f32 %v2396, 1.0
      %v2418 = vadd.f32 %v2398, 1.0
      %v2419 = vadd.f32 %v2400, 1.0
      %v2420 = vadd.f32 %v2402, 1.0
      %v2421 = vadd.f32 %v2404, 1.0
      %v2422 = vadd.f32 %v2406, 1.0
      %v2423 = vadd.f32 %v2408, 1.0
      %v2424 = vadd.f32 %v2410, 1.0
      %v2425 = vadd.f32 %v2412, 1.0
      %v2426 = vadd.f32 %v2414, 1.0
      %v2427 = vrcp.pop %v2415
      %v2428 = vmul.f32 1.0, %v2427
      %v2429 = vrcp.pop %v2416
      %v2430 = vmul.f32 1.0, %v2429
      %v2431 = vrcp.pop %v2417
      %v2432 = vmul.f32 1.0, %v2431
      %v2433 = vrcp.pop %v2418
      %v2434 = vmul.f32 1.0, %v2433
      %v2435 = vrcp.pop %v2419
      %v2436 = vmul.f32 1.0, %v2435
      %v2437 = vrcp.pop %v2420
      %v2438 = vmul.f32 1.0, %v2437
      %v2439 = vrcp.pop %v2421
      %v2440 = vmul.f32 1.0, %v2439
      %v2441 = vrcp.pop %v2422
      %v2442 = vmul.f32 1.0, %v2441
      %v2443 = vrcp.pop %v2423
      %v2444 = vmul.f32 1.0, %v2443
      %v2445 = vrcp.pop %v2424
      %v2446 = vmul.f32 1.0, %v2445
      %v2447 = vrcp.pop %v2425
      %v2448 = vmul.f32 1.0, %v2447
      %v2449 = vrcp.pop %v2426
      %v2450 = vmul.f32 1.0, %v2449
      %2451 = vst [vmem:[%s278] sm:$0xff] %v2428
      %2452 = vst [vmem:[%s278 + $0x8] sm:$0xff] %v2430
      %2453 = vst [vmem:[%s278 + $0x10] sm:$0xff] %v2432
      %2454 = vst [vmem:[%s278 + $0x18] sm:$0xff] %v2434
      %2455 = vst [vmem:[%s278 + $0x20] sm:$0xff] %v2436
      %2456 = vst [vmem:[%s278 + $0x28] sm:$0xff] %v2438
      %2457 = vst [vmem:[%s278 + $0x30] sm:$0xff] %v2440
      %2458 = vst [vmem:[%s278 + $0x38] sm:$0xff] %v2442
      %2459 = vst [vmem:[%s278 + $0x40] sm:$0xff] %v2444
      %2460 = vst [vmem:[%s278 + $0x48] sm:$0xff] %v2446
      %2461 = vst [vmem:[%s278 + $0x50] sm:$0xff] %v2448
      %2462 = vst [vmem:[%s278 + $0x58] sm:$0xff] %v2450
      %p2463 = scmp.lt.s32.totalorder %s18, 1
      %s2464 = scalar_select %p2463, %s18, 1
      %s2465 = smul.addr %s2464, 12
      %s2466 = smul.addr %s2465, 8
      %s2467 = scalar_lea.vmem %s7, %s2466
      // Predicated region
      $region49: #{mlp_forward.1} parent=47 // pred_check
        %p2468 = pneg %p188
      $region50: #{mlp_forward.1} parent=47 // pred_check_branch
        %2470 = sbr.rel (%p2468) target = $region52
      $region51: #{mlp_forward.1} parent=47 // pred_region
        _
      $region52: #{mlp_forward.1} parent=47 // pred_fallthru
        _
    $region48: #{mlp_forward.1} parent=5 // pred_fallthru
      _
    %p2471 = scmp.le.s32.totalorder 2, %s13
    // Predicated region
    $region53: #{mlp_forward.1} parent=5 // pred_check
      %p2472 = pneg %p2471
    $region54: #{mlp_forward.1} parent=5 // pred_check_branch
      %2474 = sbr.rel (%p2472) target = $region56
    $region55: #{mlp_forward.1} parent=5 // pred_region
      %s2475 = ssub.s32 %s13, 2
      // Predicated region
      $region57: #{mlp_forward.1} parent=55 // pred_check
        %p2476 = pneg %p194
      $region58: #{mlp_forward.1} parent=55 // pred_check_branch
        %2478 = sbr.rel (%p2476) target = $region60
      $region59: #{mlp_forward.1} parent=55 // pred_region
        %p2479 = scmp.lt.s32.totalorder %s19, 1
        %s2480 = scalar_select %p2479, %s19, 1
        %s2481 = smul.addr %s2480, 12
        %s2482 = smul.addr %s2481, 8
        %s2483 = scalar_lea.vmem %s7, %s2482
      $region60: #{mlp_forward.1} parent=55 // pred_fallthru
        _
    $region56: #{mlp_forward.1} parent=5 // pred_fallthru
      _
  $region6: #{mlp_forward.1} parent=0 // loop_footer
    %s17 = sadd.s32 1, %s13
  $region7: #{mlp_forward.1} parent=0 // loop_footer_branch
    %12 = sbr.rel target = $region3
  $region8: #{mlp_forward.1} parent=0 // loop_exit
    _

</llo_original>
